<compile_context>
chip_gen: v5e
topology: v5e:2x2
jax: 0.10.0
libtpu: 0.0.40
codegen_flags: <defaults>
</compile_context>

<pallas_src>
import functools
import math

import jax
import jax.numpy as jnp
import numpy as np
from jax import lax
from jax.experimental import pallas as pl
from jax.experimental.pallas import tpu as pltpu


# --------------------------------------------------------------------------
# Fused Pallas kernel: Q/K/V projection + attention + output projection
# --------------------------------------------------------------------------

def _fused_mha_kernel(q_ref, k_ref, v_ref, wq_ref, wk_ref, wv_ref, wo_ref,
                      out_ref, attw_ref, *, B, H, dk):
    """All-in-one forward.

    q_ref:  (B, T, D)   query, batch-major
    k_ref:  (B, S, D)   key
    v_ref:  (B, S, D)   value
    wq_ref: (D, D)      composed W_Q_eff (already scaled by 1/sqrt(dk))
    wk_ref: (D, D)      composed W_K_eff
    wv_ref: (D, D)      composed W_V_eff
    wo_ref: (D, D)      W_O.weight.T
    out_ref:  (B, T, D) attention output (pre final (T,B,D) transpose, done in wrapper)
    attw_ref: (B*H, T, S) attention weights
    """
    wq = wq_ref[...]
    wk = wk_ref[...]
    wv = wv_ref[...]
    wo = wo_ref[...]

    # Fully unrolled — B*H is tiny; unrolled in-kernel loops have no per-grid-step cost.
    for b in range(B):
        xq = q_ref[b]                                                  # (T, D)
        xk = k_ref[b]                                                  # (S, D)
        xv = v_ref[b]                                                  # (S, D)

        qb = jnp.dot(xq, wq, preferred_element_type=jnp.float32)      # (T, D), pre-scaled
        kb = jnp.dot(xk, wk, preferred_element_type=jnp.float32)      # (S, D)
        vb = jnp.dot(xv, wv, preferred_element_type=jnp.float32)      # (S, D)

        out_b = None
        for h in range(H):
            lo, hi = h * dk, (h + 1) * dk
            qh = qb[:, lo:hi]                                          # (T, dk)
            kh = kb[:, lo:hi]                                          # (S, dk)
            vh = vb[:, lo:hi]                                          # (S, dk)

            # scores = qh @ kh^T without an explicit transpose: contract on dk.
            scores = lax.dot_general(
                qh, kh, (((1,), (1,)), ((), ())),
                preferred_element_type=jnp.float32)                    # (T, S)

            m = jnp.max(scores, axis=-1, keepdims=True)
            p = jnp.exp(scores - m)
            denom = jnp.sum(p, axis=-1, keepdims=True)
            w = p * pl.reciprocal(denom, approx=True)                  # softmax weights
            attw_ref[b * H + h] = w

            oh = jnp.dot(w, vh, preferred_element_type=jnp.float32)    # (T, dk)
            # W_O applied per-head-slice and summed == concat(heads) @ W_O.T
            contrib = jnp.dot(oh, wo[lo:hi, :],
                              preferred_element_type=jnp.float32)      # (T, D)
            out_b = contrib if out_b is None else out_b + contrib

        out_ref[b] = out_b


def decomp_mha_forward(params, query, key, value, num_heads):
    """Matches Decomp_MultiHeadAttention.forward (mask=None, padding_mask=None,
    eval-mode dropout, batch_first=False). Returns (out (T,B,D), attn_weights (B*H,T,S))."""
    T, B, D = query.shape
    S = key.shape[0]
    H = num_heads
    dk = D // H
    hp = lax.Precision.HIGHEST  # composition is tiny; keep it exact

    def compose(W0, W1, W2):
        # W_eff[a*dk + c, d] = sum_r W1[a,r] W2[c,r] W0[d,r]
        return jnp.einsum('ar,cr,dr->acd', W1, W2, W0, precision=hp).reshape(D, D)

    wq_eff = compose(params['W_Q0'], params['W_Q1'], params['W_Q2']) * (1.0 / math.sqrt(dk))
    wk_eff = compose(params['W_K0'], params['W_K1'], params['W_K2'])
    wv_eff = compose(params['W_V0'], params['W_V1'], params['W_V2'])
    wo_t = params['W_O'].T  # nn.Linear(bias=False): y = x @ W.T

    # Batch-major inputs so every in-kernel load is a contiguous (seq, D) slab.
    qB = jnp.transpose(query, (1, 0, 2))   # (B, T, D)
    kB = jnp.transpose(key, (1, 0, 2))     # (B, S, D)
    vB = jnp.transpose(value, (1, 0, 2))   # (B, S, D)

    kernel = functools.partial(_fused_mha_kernel, B=B, H=H, dk=dk)

    out_btd, attn_w = pl.pallas_call(
        kernel,
        out_shape=(
            jax.ShapeDtypeStruct((B, T, D), jnp.float32),
            jax.ShapeDtypeStruct((B * H, T, S), jnp.float32),
        ),
        grid=(1,),
        in_specs=[
            pl.BlockSpec((B, T, D), lambda i: (0, 0, 0)),
            pl.BlockSpec((B, S, D), lambda i: (0, 0, 0)),
            pl.BlockSpec((B, S, D), lambda i: (0, 0, 0)),
            pl.BlockSpec((D, D), lambda i: (0, 0)),
            pl.BlockSpec((D, D), lambda i: (0, 0)),
            pl.BlockSpec((D, D), lambda i: (0, 0)),
            pl.BlockSpec((D, D), lambda i: (0, 0)),
        ],
        out_specs=(
            pl.BlockSpec((B, T, D), lambda i: (0, 0, 0)),
            pl.BlockSpec((B * H, T, S), lambda i: (0, 0, 0)),
        ),
        compiler_params=pltpu.CompilerParams(dimension_semantics=("arbitrary",)),
    )(qB, kB, vB, wq_eff, wk_eff, wv_eff, wo_t)

    out = jnp.transpose(out_btd, (1, 0, 2))   # (T, B, D)
    return out, attn_w


# --------------------------------------------------------------------------
# Ground-truth reference: float64 numpy, following torch's reshapes literally
# --------------------------------------------------------------------------

def reference_forward_np(params, query, key, value, num_heads):
    q = np.asarray(query, np.float64)
    k = np.asarray(key, np.float64)
    v = np.asarray(value, np.float64)
    T, B, D = q.shape
    S = k.shape[0]
    H = num_heads
    dk = D // H
    P = {n: np.asarray(params[n], np.float64) for n in params}

    q_in = q.reshape(B, -1, H, dk)
    k_in = k.reshape(B, -1, H, dk)
    v_in = v.reshape(B, -1, H, dk)

    def proj(x, W0, W1, W2):
        t = np.einsum('bqac,cr->bqar', x, W2)
        t = np.einsum('bqar,ar->bqr', t, W1)
        return np.einsum('bqr,dr->bqd', t, W0)

    qp = proj(q_in, P['W_Q0'], P['W_Q1'], P['W_Q2'])
    kp = proj(k_in, P['W_K0'], P['W_K1'], P['W_K2'])
    vp = proj(v_in, P['W_V0'], P['W_V1'], P['W_V2'])

    Q = qp.reshape(-1, B * H, dk).transpose(1, 0, 2)
    K = kp.reshape(-1, B * H, dk).transpose(1, 0, 2)
    V = vp.reshape(-1, B * H, dk).transpose(1, 0, 2)

    scores = np.matmul(Q, K.transpose(0, 2, 1)) / np.sqrt(dk)
    scores = scores - scores.max(-1, keepdims=True)
    w = np.exp(scores)
    w = w / w.sum(-1, keepdims=True)
    attn = np.matmul(w, V)                                   # (B*H, T, dk)
    attn = attn.transpose(1, 0, 2).reshape(T, B, D)          # (T, B, D)
    out = np.matmul(attn, P['W_O'].T)
    return out, w


# --------------------------------------------------------------------------
# Deterministic parameter init (xavier_normal_, as in _reset_parameters)
# --------------------------------------------------------------------------

def xavier_normal(rng, shape):
    fan_out, fan_in = shape[0], shape[1]
    std = math.sqrt(2.0 / (fan_in + fan_out))
    return std * jax.random.normal(rng, shape, dtype=jnp.float32)


if __name__ == "__main__":
    D_MODEL, NUM_HEADS, RANK = 32, 4, 4
    DK = D_MODEL // NUM_HEADS
    TGT_LEN, SRC_LEN, BATCH = 8, 8, 2

    root = jax.random.PRNGKey(0)
    ks = jax.random.split(root, 14)
    params = {
        'W_Q0': xavier_normal(ks[0], (D_MODEL, RANK)),
        'W_Q1': xavier_normal(ks[1], (NUM_HEADS, RANK)),
        'W_Q2': xavier_normal(ks[2], (DK, RANK)),
        'W_K0': xavier_normal(ks[3], (D_MODEL, RANK)),
        'W_K1': xavier_normal(ks[4], (NUM_HEADS, RANK)),
        'W_K2': xavier_normal(ks[5], (DK, RANK)),
        'W_V0': xavier_normal(ks[6], (D_MODEL, RANK)),
        'W_V1': xavier_normal(ks[7], (NUM_HEADS, RANK)),
        'W_V2': xavier_normal(ks[8], (DK, RANK)),
        'W_O': xavier_normal(ks[9], (D_MODEL, D_MODEL)),  # nn.Linear weight (out, in)
    }

    query = jax.random.normal(ks[10], (TGT_LEN, BATCH, D_MODEL), dtype=jnp.float32)
    key_t = jax.random.normal(ks[11], (SRC_LEN, BATCH, D_MODEL), dtype=jnp.float32)
    value_t = jax.random.normal(ks[12], (SRC_LEN, BATCH, D_MODEL), dtype=jnp.float32)

    fwd = jax.jit(functools.partial(decomp_mha_forward, num_heads=NUM_HEADS))
    out, attn_w = fwd(params, query, key_t, value_t)
    out, attn_w = jax.block_until_ready((out, attn_w))

    assert out.shape == (TGT_LEN, BATCH, D_MODEL)
    assert attn_w.shape == (BATCH * NUM_HEADS, TGT_LEN, SRC_LEN)

    ref_out, ref_w = reference_forward_np(params, query, key_t, value_t, NUM_HEADS)
    # Kernel uses default-precision f32 MXU matmuls and an approx reciprocal (per perf
    # review), so compare against the f64 reference with a correspondingly relaxed tol.
    np.testing.assert_allclose(np.asarray(out), ref_out, rtol=2e-2, atol=2e-2)
    np.testing.assert_allclose(np.asarray(attn_w), ref_w, rtol=2e-2, atol=2e-2)

    print("KERNEL_OK")
</pallas_src>

<mosaic_0001>
module attributes {stable_mosaic.version = 11 : i64} {
  func.func @_fused_mha_kernel(%arg0: i32, %arg1: memref<2x8x32xf32, #tpu.memory_space<vmem>>, %arg2: memref<2x8x32xf32, #tpu.memory_space<vmem>>, %arg3: memref<2x8x32xf32, #tpu.memory_space<vmem>>, %arg4: memref<32x32xf32, #tpu.memory_space<vmem>>, %arg5: memref<32x32xf32, #tpu.memory_space<vmem>>, %arg6: memref<32x32xf32, #tpu.memory_space<vmem>>, %arg7: memref<32x32xf32, #tpu.memory_space<vmem>>, %arg8: memref<2x8x32xf32, #tpu.memory_space<vmem>>, %arg9: memref<8x8x8xf32, #tpu.memory_space<vmem>>) attributes {dimension_semantics = [#tpu.dimension_semantics<arbitrary>], iteration_bounds = array<i64: 1>, scalar_prefetch = 0 : i64, scratch_operands = 0 : i64, tpu.core_type = #tpu.core_type<tc>, window_params = [{pipeline_mode = #tpu.pipeline_mode<synchronous>, transform_indices = @transform_0, window_bounds = array<i64: 2, 8, 32>}, {pipeline_mode = #tpu.pipeline_mode<synchronous>, transform_indices = @transform_1, window_bounds = array<i64: 2, 8, 32>}, {pipeline_mode = #tpu.pipeline_mode<synchronous>, transform_indices = @transform_2, window_bounds = array<i64: 2, 8, 32>}, {pipeline_mode = #tpu.pipeline_mode<synchronous>, transform_indices = @transform_3, window_bounds = array<i64: 32, 32>}, {pipeline_mode = #tpu.pipeline_mode<synchronous>, transform_indices = @transform_4, window_bounds = array<i64: 32, 32>}, {pipeline_mode = #tpu.pipeline_mode<synchronous>, transform_indices = @transform_5, window_bounds = array<i64: 32, 32>}, {pipeline_mode = #tpu.pipeline_mode<synchronous>, transform_indices = @transform_6, window_bounds = array<i64: 32, 32>}, {pipeline_mode = #tpu.pipeline_mode<synchronous>, transform_indices = @transform_7, window_bounds = array<i64: 2, 8, 32>}, {pipeline_mode = #tpu.pipeline_mode<synchronous>, transform_indices = @transform_8, window_bounds = array<i64: 8, 8, 8>}]} {
    %c0 = arith.constant 0 : index
    %c0_0 = arith.constant 0 : index
    %0 = vector.load %arg4[%c0, %c0_0] : memref<32x32xf32, #tpu.memory_space<vmem>>, vector<32x32xf32>
    %c0_1 = arith.constant 0 : index
    %c0_2 = arith.constant 0 : index
    %1 = vector.load %arg5[%c0_1, %c0_2] : memref<32x32xf32, #tpu.memory_space<vmem>>, vector<32x32xf32>
    %c0_3 = arith.constant 0 : index
    %c0_4 = arith.constant 0 : index
    %2 = vector.load %arg6[%c0_3, %c0_4] : memref<32x32xf32, #tpu.memory_space<vmem>>, vector<32x32xf32>
    %c0_5 = arith.constant 0 : index
    %c0_6 = arith.constant 0 : index
    %3 = vector.load %arg7[%c0_5, %c0_6] : memref<32x32xf32, #tpu.memory_space<vmem>>, vector<32x32xf32>
    %c0_7 = arith.constant 0 : index
    %c0_8 = arith.constant 0 : index
    %c0_9 = arith.constant 0 : index
    %4 = vector.load %arg1[%c0_7, %c0_8, %c0_9] : memref<2x8x32xf32, #tpu.memory_space<vmem>>, vector<1x8x32xf32>
    %5 = vector.shape_cast %4 : vector<1x8x32xf32> to vector<8x32xf32>
    %c0_10 = arith.constant 0 : index
    %c0_11 = arith.constant 0 : index
    %c0_12 = arith.constant 0 : index
    %6 = vector.load %arg2[%c0_10, %c0_11, %c0_12] : memref<2x8x32xf32, #tpu.memory_space<vmem>>, vector<1x8x32xf32>
    %7 = vector.shape_cast %6 : vector<1x8x32xf32> to vector<8x32xf32>
    %c0_13 = arith.constant 0 : index
    %c0_14 = arith.constant 0 : index
    %c0_15 = arith.constant 0 : index
    %8 = vector.load %arg3[%c0_13, %c0_14, %c0_15] : memref<2x8x32xf32, #tpu.memory_space<vmem>>, vector<1x8x32xf32>
    %9 = vector.shape_cast %8 : vector<1x8x32xf32> to vector<8x32xf32>
    %cst = arith.constant dense<0.000000e+00> : vector<8x32xf32>
    %10 = tpu.matmul %5, %0, %cst {dimension_numbers = #tpu.dot_dimension_numbers<[1], [0], [0], [1], [0, 0, 1, 1], [], []>} : vector<8x32xf32>, vector<32x32xf32>, vector<8x32xf32> -> vector<8x32xf32>
    %cst_16 = arith.constant dense<0.000000e+00> : vector<8x32xf32>
    %11 = tpu.matmul %7, %1, %cst_16 {dimension_numbers = #tpu.dot_dimension_numbers<[1], [0], [0], [1], [0, 0, 1, 1], [], []>} : vector<8x32xf32>, vector<32x32xf32>, vector<8x32xf32> -> vector<8x32xf32>
    %cst_17 = arith.constant dense<0.000000e+00> : vector<8x32xf32>
    %12 = tpu.matmul %9, %2, %cst_17 {dimension_numbers = #tpu.dot_dimension_numbers<[1], [0], [0], [1], [0, 0, 1, 1], [], []>} : vector<8x32xf32>, vector<32x32xf32>, vector<8x32xf32> -> vector<8x32xf32>
    %13 = vector.extract_strided_slice %10 {offsets = [0, 0], sizes = [8, 8], strides = [1, 1]} : vector<8x32xf32> to vector<8x8xf32>
    %14 = vector.extract_strided_slice %11 {offsets = [0, 0], sizes = [8, 8], strides = [1, 1]} : vector<8x32xf32> to vector<8x8xf32>
    %15 = vector.extract_strided_slice %12 {offsets = [0, 0], sizes = [8, 8], strides = [1, 1]} : vector<8x32xf32> to vector<8x8xf32>
    %cst_18 = arith.constant dense<0.000000e+00> : vector<8x8xf32>
    %16 = tpu.matmul %13, %14, %cst_18 {dimension_numbers = #tpu.dot_dimension_numbers<[1], [1], [0], [0], [0, 0, 1, 0], [], []>} : vector<8x8xf32>, vector<8x8xf32>, vector<8x8xf32> -> vector<8x8xf32>
    %cst_19 = arith.constant dense<0xFF800000> : vector<8xf32>
    %17 = vector.multi_reduction <maximumf>, %16, %cst_19 [1] : vector<8x8xf32> to vector<8xf32>
    %18 = vector.shape_cast %17 : vector<8xf32> to vector<8x1xf32>
    %19 = vector.broadcast %18 : vector<8x1xf32> to vector<8x8xf32>
    %20 = arith.subf %16, %19 : vector<8x8xf32>
    %21 = math.exp %20 : vector<8x8xf32>
    %cst_20 = arith.constant dense<0.000000e+00> : vector<8xf32>
    %22 = vector.multi_reduction <add>, %21, %cst_20 [1] : vector<8x8xf32> to vector<8xf32>
    %23 = vector.shape_cast %22 : vector<8xf32> to vector<8x1xf32>
    %24 = tpu.reciprocal %23 {approx = true} : vector<8x1xf32> -> vector<8x1xf32>
    %25 = vector.broadcast %24 : vector<8x1xf32> to vector<8x8xf32>
    %26 = arith.mulf %21, %25 : vector<8x8xf32>
    %c0_21 = arith.constant 0 : index
    %c0_22 = arith.constant 0 : index
    %c0_23 = arith.constant 0 : index
    %27 = vector.load %arg9[%c0_21, %c0_22, %c0_23] : memref<8x8x8xf32, #tpu.memory_space<vmem>>, vector<1x8x8xf32>
    %28 = vector.shape_cast %27 : vector<1x8x8xf32> to vector<8x8xf32>
    %29 = vector.shape_cast %26 : vector<8x8xf32> to vector<1x8x8xf32>
    tpu.vector_store %arg9[%c0_21, %c0_22, %c0_23], %29 {strides = array<i32>} : memref<8x8x8xf32, #tpu.memory_space<vmem>>, vector<1x8x8xf32>,
    %cst_24 = arith.constant dense<0.000000e+00> : vector<8x8xf32>
    %30 = tpu.matmul %26, %15, %cst_24 {dimension_numbers = #tpu.dot_dimension_numbers<[1], [0], [0], [1], [0, 0, 1, 1], [], []>} : vector<8x8xf32>, vector<8x8xf32>, vector<8x8xf32> -> vector<8x8xf32>
    %31 = vector.extract_strided_slice %3 {offsets = [0, 0], sizes = [8, 32], strides = [1, 1]} : vector<32x32xf32> to vector<8x32xf32>
    %cst_25 = arith.constant dense<0.000000e+00> : vector<8x32xf32>
    %32 = tpu.matmul %30, %31, %cst_25 {dimension_numbers = #tpu.dot_dimension_numbers<[1], [0], [0], [1], [0, 0, 1, 1], [], []>} : vector<8x8xf32>, vector<8x32xf32>, vector<8x32xf32> -> vector<8x32xf32>
    %33 = vector.extract_strided_slice %10 {offsets = [0, 8], sizes = [8, 8], strides = [1, 1]} : vector<8x32xf32> to vector<8x8xf32>
    %34 = vector.extract_strided_slice %11 {offsets = [0, 8], sizes = [8, 8], strides = [1, 1]} : vector<8x32xf32> to vector<8x8xf32>
    %35 = vector.extract_strided_slice %12 {offsets = [0, 8], sizes = [8, 8], strides = [1, 1]} : vector<8x32xf32> to vector<8x8xf32>
    %cst_26 = arith.constant dense<0.000000e+00> : vector<8x8xf32>
    %36 = tpu.matmul %33, %34, %cst_26 {dimension_numbers = #tpu.dot_dimension_numbers<[1], [1], [0], [0], [0, 0, 1, 0], [], []>} : vector<8x8xf32>, vector<8x8xf32>, vector<8x8xf32> -> vector<8x8xf32>
    %cst_27 = arith.constant dense<0xFF800000> : vector<8xf32>
    %37 = vector.multi_reduction <maximumf>, %36, %cst_27 [1] : vector<8x8xf32> to vector<8xf32>
    %38 = vector.shape_cast %37 : vector<8xf32> to vector<8x1xf32>
    %39 = vector.broadcast %38 : vector<8x1xf32> to vector<8x8xf32>
    %40 = arith.subf %36, %39 : vector<8x8xf32>
    %41 = math.exp %40 : vector<8x8xf32>
    %cst_28 = arith.constant dense<0.000000e+00> : vector<8xf32>
    %42 = vector.multi_reduction <add>, %41, %cst_28 [1] : vector<8x8xf32> to vector<8xf32>
    %43 = vector.shape_cast %42 : vector<8xf32> to vector<8x1xf32>
    %44 = tpu.reciprocal %43 {approx = true} : vector<8x1xf32> -> vector<8x1xf32>
    %45 = vector.broadcast %44 : vector<8x1xf32> to vector<8x8xf32>
    %46 = arith.mulf %41, %45 : vector<8x8xf32>
    %c1 = arith.constant 1 : index
    %c0_29 = arith.constant 0 : index
    %c0_30 = arith.constant 0 : index
    %47 = vector.load %arg9[%c1, %c0_29, %c0_30] : memref<8x8x8xf32, #tpu.memory_space<vmem>>, vector<1x8x8xf32>
    %48 = vector.shape_cast %47 : vector<1x8x8xf32> to vector<8x8xf32>
    %49 = vector.shape_cast %46 : vector<8x8xf32> to vector<1x8x8xf32>
    tpu.vector_store %arg9[%c1, %c0_29, %c0_30], %49 {strides = array<i32>} : memref<8x8x8xf32, #tpu.memory_space<vmem>>, vector<1x8x8xf32>,
    %cst_31 = arith.constant dense<0.000000e+00> : vector<8x8xf32>
    %50 = tpu.matmul %46, %35, %cst_31 {dimension_numbers = #tpu.dot_dimension_numbers<[1], [0], [0], [1], [0, 0, 1, 1], [], []>} : vector<8x8xf32>, vector<8x8xf32>, vector<8x8xf32> -> vector<8x8xf32>
    %51 = vector.extract_strided_slice %3 {offsets = [8, 0], sizes = [8, 32], strides = [1, 1]} : vector<32x32xf32> to vector<8x32xf32>
    %cst_32 = arith.constant dense<0.000000e+00> : vector<8x32xf32>
    %52 = tpu.matmul %50, %51, %cst_32 {dimension_numbers = #tpu.dot_dimension_numbers<[1], [0], [0], [1], [0, 0, 1, 1], [], []>} : vector<8x8xf32>, vector<8x32xf32>, vector<8x32xf32> -> vector<8x32xf32>
    %53 = arith.addf %32, %52 : vector<8x32xf32>
    %54 = vector.extract_strided_slice %10 {offsets = [0, 16], sizes = [8, 8], strides = [1, 1]} : vector<8x32xf32> to vector<8x8xf32>
    %55 = vector.extract_strided_slice %11 {offsets = [0, 16], sizes = [8, 8], strides = [1, 1]} : vector<8x32xf32> to vector<8x8xf32>
    %56 = vector.extract_strided_slice %12 {offsets = [0, 16], sizes = [8, 8], strides = [1, 1]} : vector<8x32xf32> to vector<8x8xf32>
    %cst_33 = arith.constant dense<0.000000e+00> : vector<8x8xf32>
    %57 = tpu.matmul %54, %55, %cst_33 {dimension_numbers = #tpu.dot_dimension_numbers<[1], [1], [0], [0], [0, 0, 1, 0], [], []>} : vector<8x8xf32>, vector<8x8xf32>, vector<8x8xf32> -> vector<8x8xf32>
    %cst_34 = arith.constant dense<0xFF800000> : vector<8xf32>
    %58 = vector.multi_reduction <maximumf>, %57, %cst_34 [1] : vector<8x8xf32> to vector<8xf32>
    %59 = vector.shape_cast %58 : vector<8xf32> to vector<8x1xf32>
    %60 = vector.broadcast %59 : vector<8x1xf32> to vector<8x8xf32>
    %61 = arith.subf %57, %60 : vector<8x8xf32>
    %62 = math.exp %61 : vector<8x8xf32>
    %cst_35 = arith.constant dense<0.000000e+00> : vector<8xf32>
    %63 = vector.multi_reduction <add>, %62, %cst_35 [1] : vector<8x8xf32> to vector<8xf32>
    %64 = vector.shape_cast %63 : vector<8xf32> to vector<8x1xf32>
    %65 = tpu.reciprocal %64 {approx = true} : vector<8x1xf32> -> vector<8x1xf32>
    %66 = vector.broadcast %65 : vector<8x1xf32> to vector<8x8xf32>
    %67 = arith.mulf %62, %66 : vector<8x8xf32>
    %c2 = arith.constant 2 : index
    %c0_36 = arith.constant 0 : index
    %c0_37 = arith.constant 0 : index
    %68 = vector.load %arg9[%c2, %c0_36, %c0_37] : memref<8x8x8xf32, #tpu.memory_space<vmem>>, vector<1x8x8xf32>
    %69 = vector.shape_cast %68 : vector<1x8x8xf32> to vector<8x8xf32>
    %70 = vector.shape_cast %67 : vector<8x8xf32> to vector<1x8x8xf32>
    tpu.vector_store %arg9[%c2, %c0_36, %c0_37], %70 {strides = array<i32>} : memref<8x8x8xf32, #tpu.memory_space<vmem>>, vector<1x8x8xf32>,
    %cst_38 = arith.constant dense<0.000000e+00> : vector<8x8xf32>
    %71 = tpu.matmul %67, %56, %cst_38 {dimension_numbers = #tpu.dot_dimension_numbers<[1], [0], [0], [1], [0, 0, 1, 1], [], []>} : vector<8x8xf32>, vector<8x8xf32>, vector<8x8xf32> -> vector<8x8xf32>
    %72 = vector.extract_strided_slice %3 {offsets = [16, 0], sizes = [8, 32], strides = [1, 1]} : vector<32x32xf32> to vector<8x32xf32>
    %cst_39 = arith.constant dense<0.000000e+00> : vector<8x32xf32>
    %73 = tpu.matmul %71, %72, %cst_39 {dimension_numbers = #tpu.dot_dimension_numbers<[1], [0], [0], [1], [0, 0, 1, 1], [], []>} : vector<8x8xf32>, vector<8x32xf32>, vector<8x32xf32> -> vector<8x32xf32>
    %74 = arith.addf %53, %73 : vector<8x32xf32>
    %75 = vector.extract_strided_slice %10 {offsets = [0, 24], sizes = [8, 8], strides = [1, 1]} : vector<8x32xf32> to vector<8x8xf32>
    %76 = vector.extract_strided_slice %11 {offsets = [0, 24], sizes = [8, 8], strides = [1, 1]} : vector<8x32xf32> to vector<8x8xf32>
    %77 = vector.extract_strided_slice %12 {offsets = [0, 24], sizes = [8, 8], strides = [1, 1]} : vector<8x32xf32> to vector<8x8xf32>
    %cst_40 = arith.constant dense<0.000000e+00> : vector<8x8xf32>
    %78 = tpu.matmul %75, %76, %cst_40 {dimension_numbers = #tpu.dot_dimension_numbers<[1], [1], [0], [0], [0, 0, 1, 0], [], []>} : vector<8x8xf32>, vector<8x8xf32>, vector<8x8xf32> -> vector<8x8xf32>
    %cst_41 = arith.constant dense<0xFF800000> : vector<8xf32>
    %79 = vector.multi_reduction <maximumf>, %78, %cst_41 [1] : vector<8x8xf32> to vector<8xf32>
    %80 = vector.shape_cast %79 : vector<8xf32> to vector<8x1xf32>
    %81 = vector.broadcast %80 : vector<8x1xf32> to vector<8x8xf32>
    %82 = arith.subf %78, %81 : vector<8x8xf32>
    %83 = math.exp %82 : vector<8x8xf32>
    %cst_42 = arith.constant dense<0.000000e+00> : vector<8xf32>
    %84 = vector.multi_reduction <add>, %83, %cst_42 [1] : vector<8x8xf32> to vector<8xf32>
    %85 = vector.shape_cast %84 : vector<8xf32> to vector<8x1xf32>
    %86 = tpu.reciprocal %85 {approx = true} : vector<8x1xf32> -> vector<8x1xf32>
    %87 = vector.broadcast %86 : vector<8x1xf32> to vector<8x8xf32>
    %88 = arith.mulf %83, %87 : vector<8x8xf32>
    %c3 = arith.constant 3 : index
    %c0_43 = arith.constant 0 : index
    %c0_44 = arith.constant 0 : index
    %89 = vector.load %arg9[%c3, %c0_43, %c0_44] : memref<8x8x8xf32, #tpu.memory_space<vmem>>, vector<1x8x8xf32>
    %90 = vector.shape_cast %89 : vector<1x8x8xf32> to vector<8x8xf32>
    %91 = vector.shape_cast %88 : vector<8x8xf32> to vector<1x8x8xf32>
    tpu.vector_store %arg9[%c3, %c0_43, %c0_44], %91 {strides = array<i32>} : memref<8x8x8xf32, #tpu.memory_space<vmem>>, vector<1x8x8xf32>,
    %cst_45 = arith.constant dense<0.000000e+00> : vector<8x8xf32>
    %92 = tpu.matmul %88, %77, %cst_45 {dimension_numbers = #tpu.dot_dimension_numbers<[1], [0], [0], [1], [0, 0, 1, 1], [], []>} : vector<8x8xf32>, vector<8x8xf32>, vector<8x8xf32> -> vector<8x8xf32>
    %93 = vector.extract_strided_slice %3 {offsets = [24, 0], sizes = [8, 32], strides = [1, 1]} : vector<32x32xf32> to vector<8x32xf32>
    %cst_46 = arith.constant dense<0.000000e+00> : vector<8x32xf32>
    %94 = tpu.matmul %92, %93, %cst_46 {dimension_numbers = #tpu.dot_dimension_numbers<[1], [0], [0], [1], [0, 0, 1, 1], [], []>} : vector<8x8xf32>, vector<8x32xf32>, vector<8x32xf32> -> vector<8x32xf32>
    %95 = arith.addf %74, %94 : vector<8x32xf32>
    %c0_47 = arith.constant 0 : index
    %c0_48 = arith.constant 0 : index
    %c0_49 = arith.constant 0 : index
    %96 = vector.load %arg8[%c0_47, %c0_48, %c0_49] : memref<2x8x32xf32, #tpu.memory_space<vmem>>, vector<1x8x32xf32>
    %97 = vector.shape_cast %96 : vector<1x8x32xf32> to vector<8x32xf32>
    %98 = vector.shape_cast %95 : vector<8x32xf32> to vector<1x8x32xf32>
    tpu.vector_store %arg8[%c0_47, %c0_48, %c0_49], %98 {strides = array<i32>} : memref<2x8x32xf32, #tpu.memory_space<vmem>>, vector<1x8x32xf32>,
    %c1_50 = arith.constant 1 : index
    %c0_51 = arith.constant 0 : index
    %c0_52 = arith.constant 0 : index
    %99 = vector.load %arg1[%c1_50, %c0_51, %c0_52] : memref<2x8x32xf32, #tpu.memory_space<vmem>>, vector<1x8x32xf32>
    %100 = vector.shape_cast %99 : vector<1x8x32xf32> to vector<8x32xf32>
    %c1_53 = arith.constant 1 : index
    %c0_54 = arith.constant 0 : index
    %c0_55 = arith.constant 0 : index
    %101 = vector.load %arg2[%c1_53, %c0_54, %c0_55] : memref<2x8x32xf32, #tpu.memory_space<vmem>>, vector<1x8x32xf32>
    %102 = vector.shape_cast %101 : vector<1x8x32xf32> to vector<8x32xf32>
    %c1_56 = arith.constant 1 : index
    %c0_57 = arith.constant 0 : index
    %c0_58 = arith.constant 0 : index
    %103 = vector.load %arg3[%c1_56, %c0_57, %c0_58] : memref<2x8x32xf32, #tpu.memory_space<vmem>>, vector<1x8x32xf32>
    %104 = vector.shape_cast %103 : vector<1x8x32xf32> to vector<8x32xf32>
    %cst_59 = arith.constant dense<0.000000e+00> : vector<8x32xf32>
    %105 = tpu.matmul %100, %0, %cst_59 {dimension_numbers = #tpu.dot_dimension_numbers<[1], [0], [0], [1], [0, 0, 1, 1], [], []>} : vector<8x32xf32>, vector<32x32xf32>, vector<8x32xf32> -> vector<8x32xf32>
    %cst_60 = arith.constant dense<0.000000e+00> : vector<8x32xf32>
    %106 = tpu.matmul %102, %1, %cst_60 {dimension_numbers = #tpu.dot_dimension_numbers<[1], [0], [0], [1], [0, 0, 1, 1], [], []>} : vector<8x32xf32>, vector<32x32xf32>, vector<8x32xf32> -> vector<8x32xf32>
    %cst_61 = arith.constant dense<0.000000e+00> : vector<8x32xf32>
    %107 = tpu.matmul %104, %2, %cst_61 {dimension_numbers = #tpu.dot_dimension_numbers<[1], [0], [0], [1], [0, 0, 1, 1], [], []>} : vector<8x32xf32>, vector<32x32xf32>, vector<8x32xf32> -> vector<8x32xf32>
    %108 = vector.extract_strided_slice %105 {offsets = [0, 0], sizes = [8, 8], strides = [1, 1]} : vector<8x32xf32> to vector<8x8xf32>
    %109 = vector.extract_strided_slice %106 {offsets = [0, 0], sizes = [8, 8], strides = [1, 1]} : vector<8x32xf32> to vector<8x8xf32>
    %110 = vector.extract_strided_slice %107 {offsets = [0, 0], sizes = [8, 8], strides = [1, 1]} : vector<8x32xf32> to vector<8x8xf32>
    %cst_62 = arith.constant dense<0.000000e+00> : vector<8x8xf32>
    %111 = tpu.matmul %108, %109, %cst_62 {dimension_numbers = #tpu.dot_dimension_numbers<[1], [1], [0], [0], [0, 0, 1, 0], [], []>} : vector<8x8xf32>, vector<8x8xf32>, vector<8x8xf32> -> vector<8x8xf32>
    %cst_63 = arith.constant dense<0xFF800000> : vector<8xf32>
    %112 = vector.multi_reduction <maximumf>, %111, %cst_63 [1] : vector<8x8xf32> to vector<8xf32>
    %113 = vector.shape_cast %112 : vector<8xf32> to vector<8x1xf32>
    %114 = vector.broadcast %113 : vector<8x1xf32> to vector<8x8xf32>
    %115 = arith.subf %111, %114 : vector<8x8xf32>
    %116 = math.exp %115 : vector<8x8xf32>
    %cst_64 = arith.constant dense<0.000000e+00> : vector<8xf32>
    %117 = vector.multi_reduction <add>, %116, %cst_64 [1] : vector<8x8xf32> to vector<8xf32>
    %118 = vector.shape_cast %117 : vector<8xf32> to vector<8x1xf32>
    %119 = tpu.reciprocal %118 {approx = true} : vector<8x1xf32> -> vector<8x1xf32>
    %120 = vector.broadcast %119 : vector<8x1xf32> to vector<8x8xf32>
    %121 = arith.mulf %116, %120 : vector<8x8xf32>
    %c4 = arith.constant 4 : index
    %c0_65 = arith.constant 0 : index
    %c0_66 = arith.constant 0 : index
    %122 = vector.load %arg9[%c4, %c0_65, %c0_66] : memref<8x8x8xf32, #tpu.memory_space<vmem>>, vector<1x8x8xf32>
    %123 = vector.shape_cast %122 : vector<1x8x8xf32> to vector<8x8xf32>
    %124 = vector.shape_cast %121 : vector<8x8xf32> to vector<1x8x8xf32>
    tpu.vector_store %arg9[%c4, %c0_65, %c0_66], %124 {strides = array<i32>} : memref<8x8x8xf32, #tpu.memory_space<vmem>>, vector<1x8x8xf32>,
    %cst_67 = arith.constant dense<0.000000e+00> : vector<8x8xf32>
    %125 = tpu.matmul %121, %110, %cst_67 {dimension_numbers = #tpu.dot_dimension_numbers<[1], [0], [0], [1], [0, 0, 1, 1], [], []>} : vector<8x8xf32>, vector<8x8xf32>, vector<8x8xf32> -> vector<8x8xf32>
    %126 = vector.extract_strided_slice %3 {offsets = [0, 0], sizes = [8, 32], strides = [1, 1]} : vector<32x32xf32> to vector<8x32xf32>
    %cst_68 = arith.constant dense<0.000000e+00> : vector<8x32xf32>
    %127 = tpu.matmul %125, %126, %cst_68 {dimension_numbers = #tpu.dot_dimension_numbers<[1], [0], [0], [1], [0, 0, 1, 1], [], []>} : vector<8x8xf32>, vector<8x32xf32>, vector<8x32xf32> -> vector<8x32xf32>
    %128 = vector.extract_strided_slice %105 {offsets = [0, 8], sizes = [8, 8], strides = [1, 1]} : vector<8x32xf32> to vector<8x8xf32>
    %129 = vector.extract_strided_slice %106 {offsets = [0, 8], sizes = [8, 8], strides = [1, 1]} : vector<8x32xf32> to vector<8x8xf32>
    %130 = vector.extract_strided_slice %107 {offsets = [0, 8], sizes = [8, 8], strides = [1, 1]} : vector<8x32xf32> to vector<8x8xf32>
    %cst_69 = arith.constant dense<0.000000e+00> : vector<8x8xf32>
    %131 = tpu.matmul %128, %129, %cst_69 {dimension_numbers = #tpu.dot_dimension_numbers<[1], [1], [0], [0], [0, 0, 1, 0], [], []>} : vector<8x8xf32>, vector<8x8xf32>, vector<8x8xf32> -> vector<8x8xf32>
    %cst_70 = arith.constant dense<0xFF800000> : vector<8xf32>
    %132 = vector.multi_reduction <maximumf>, %131, %cst_70 [1] : vector<8x8xf32> to vector<8xf32>
    %133 = vector.shape_cast %132 : vector<8xf32> to vector<8x1xf32>
    %134 = vector.broadcast %133 : vector<8x1xf32> to vector<8x8xf32>
    %135 = arith.subf %131, %134 : vector<8x8xf32>
    %136 = math.exp %135 : vector<8x8xf32>
    %cst_71 = arith.constant dense<0.000000e+00> : vector<8xf32>
    %137 = vector.multi_reduction <add>, %136, %cst_71 [1] : vector<8x8xf32> to vector<8xf32>
    %138 = vector.shape_cast %137 : vector<8xf32> to vector<8x1xf32>
    %139 = tpu.reciprocal %138 {approx = true} : vector<8x1xf32> -> vector<8x1xf32>
    %140 = vector.broadcast %139 : vector<8x1xf32> to vector<8x8xf32>
    %141 = arith.mulf %136, %140 : vector<8x8xf32>
    %c5 = arith.constant 5 : index
    %c0_72 = arith.constant 0 : index
    %c0_73 = arith.constant 0 : index
    %142 = vector.load %arg9[%c5, %c0_72, %c0_73] : memref<8x8x8xf32, #tpu.memory_space<vmem>>, vector<1x8x8xf32>
    %143 = vector.shape_cast %142 : vector<1x8x8xf32> to vector<8x8xf32>
    %144 = vector.shape_cast %141 : vector<8x8xf32> to vector<1x8x8xf32>
    tpu.vector_store %arg9[%c5, %c0_72, %c0_73], %144 {strides = array<i32>} : memref<8x8x8xf32, #tpu.memory_space<vmem>>, vector<1x8x8xf32>,
    %cst_74 = arith.constant dense<0.000000e+00> : vector<8x8xf32>
    %145 = tpu.matmul %141, %130, %cst_74 {dimension_numbers = #tpu.dot_dimension_numbers<[1], [0], [0], [1], [0, 0, 1, 1], [], []>} : vector<8x8xf32>, vector<8x8xf32>, vector<8x8xf32> -> vector<8x8xf32>
    %146 = vector.extract_strided_slice %3 {offsets = [8, 0], sizes = [8, 32], strides = [1, 1]} : vector<32x32xf32> to vector<8x32xf32>
    %cst_75 = arith.constant dense<0.000000e+00> : vector<8x32xf32>
    %147 = tpu.matmul %145, %146, %cst_75 {dimension_numbers = #tpu.dot_dimension_numbers<[1], [0], [0], [1], [0, 0, 1, 1], [], []>} : vector<8x8xf32>, vector<8x32xf32>, vector<8x32xf32> -> vector<8x32xf32>
    %148 = arith.addf %127, %147 : vector<8x32xf32>
    %149 = vector.extract_strided_slice %105 {offsets = [0, 16], sizes = [8, 8], strides = [1, 1]} : vector<8x32xf32> to vector<8x8xf32>
    %150 = vector.extract_strided_slice %106 {offsets = [0, 16], sizes = [8, 8], strides = [1, 1]} : vector<8x32xf32> to vector<8x8xf32>
    %151 = vector.extract_strided_slice %107 {offsets = [0, 16], sizes = [8, 8], strides = [1, 1]} : vector<8x32xf32> to vector<8x8xf32>
    %cst_76 = arith.constant dense<0.000000e+00> : vector<8x8xf32>
    %152 = tpu.matmul %149, %150, %cst_76 {dimension_numbers = #tpu.dot_dimension_numbers<[1], [1], [0], [0], [0, 0, 1, 0], [], []>} : vector<8x8xf32>, vector<8x8xf32>, vector<8x8xf32> -> vector<8x8xf32>
    %cst_77 = arith.constant dense<0xFF800000> : vector<8xf32>
    %153 = vector.multi_reduction <maximumf>, %152, %cst_77 [1] : vector<8x8xf32> to vector<8xf32>
    %154 = vector.shape_cast %153 : vector<8xf32> to vector<8x1xf32>
    %155 = vector.broadcast %154 : vector<8x1xf32> to vector<8x8xf32>
    %156 = arith.subf %152, %155 : vector<8x8xf32>
    %157 = math.exp %156 : vector<8x8xf32>
    %cst_78 = arith.constant dense<0.000000e+00> : vector<8xf32>
    %158 = vector.multi_reduction <add>, %157, %cst_78 [1] : vector<8x8xf32> to vector<8xf32>
    %159 = vector.shape_cast %158 : vector<8xf32> to vector<8x1xf32>
    %160 = tpu.reciprocal %159 {approx = true} : vector<8x1xf32> -> vector<8x1xf32>
    %161 = vector.broadcast %160 : vector<8x1xf32> to vector<8x8xf32>
    %162 = arith.mulf %157, %161 : vector<8x8xf32>
    %c6 = arith.constant 6 : index
    %c0_79 = arith.constant 0 : index
    %c0_80 = arith.constant 0 : index
    %163 = vector.load %arg9[%c6, %c0_79, %c0_80] : memref<8x8x8xf32, #tpu.memory_space<vmem>>, vector<1x8x8xf32>
    %164 = vector.shape_cast %163 : vector<1x8x8xf32> to vector<8x8xf32>
    %165 = vector.shape_cast %162 : vector<8x8xf32> to vector<1x8x8xf32>
    tpu.vector_store %arg9[%c6, %c0_79, %c0_80], %165 {strides = array<i32>} : memref<8x8x8xf32, #tpu.memory_space<vmem>>, vector<1x8x8xf32>,
    %cst_81 = arith.constant dense<0.000000e+00> : vector<8x8xf32>
    %166 = tpu.matmul %162, %151, %cst_81 {dimension_numbers = #tpu.dot_dimension_numbers<[1], [0], [0], [1], [0, 0, 1, 1], [], []>} : vector<8x8xf32>, vector<8x8xf32>, vector<8x8xf32> -> vector<8x8xf32>
    %167 = vector.extract_strided_slice %3 {offsets = [16, 0], sizes = [8, 32], strides = [1, 1]} : vector<32x32xf32> to vector<8x32xf32>
    %cst_82 = arith.constant dense<0.000000e+00> : vector<8x32xf32>
    %168 = tpu.matmul %166, %167, %cst_82 {dimension_numbers = #tpu.dot_dimension_numbers<[1], [0], [0], [1], [0, 0, 1, 1], [], []>} : vector<8x8xf32>, vector<8x32xf32>, vector<8x32xf32> -> vector<8x32xf32>
    %169 = arith.addf %148, %168 : vector<8x32xf32>
    %170 = vector.extract_strided_slice %105 {offsets = [0, 24], sizes = [8, 8], strides = [1, 1]} : vector<8x32xf32> to vector<8x8xf32>
    %171 = vector.extract_strided_slice %106 {offsets = [0, 24], sizes = [8, 8], strides = [1, 1]} : vector<8x32xf32> to vector<8x8xf32>
    %172 = vector.extract_strided_slice %107 {offsets = [0, 24], sizes = [8, 8], strides = [1, 1]} : vector<8x32xf32> to vector<8x8xf32>
    %cst_83 = arith.constant dense<0.000000e+00> : vector<8x8xf32>
    %173 = tpu.matmul %170, %171, %cst_83 {dimension_numbers = #tpu.dot_dimension_numbers<[1], [1], [0], [0], [0, 0, 1, 0], [], []>} : vector<8x8xf32>, vector<8x8xf32>, vector<8x8xf32> -> vector<8x8xf32>
    %cst_84 = arith.constant dense<0xFF800000> : vector<8xf32>
    %174 = vector.multi_reduction <maximumf>, %173, %cst_84 [1] : vector<8x8xf32> to vector<8xf32>
    %175 = vector.shape_cast %174 : vector<8xf32> to vector<8x1xf32>
    %176 = vector.broadcast %175 : vector<8x1xf32> to vector<8x8xf32>
    %177 = arith.subf %173, %176 : vector<8x8xf32>
    %178 = math.exp %177 : vector<8x8xf32>
    %cst_85 = arith.constant dense<0.000000e+00> : vector<8xf32>
    %179 = vector.multi_reduction <add>, %178, %cst_85 [1] : vector<8x8xf32> to vector<8xf32>
    %180 = vector.shape_cast %179 : vector<8xf32> to vector<8x1xf32>
    %181 = tpu.reciprocal %180 {approx = true} : vector<8x1xf32> -> vector<8x1xf32>
    %182 = vector.broadcast %181 : vector<8x1xf32> to vector<8x8xf32>
    %183 = arith.mulf %178, %182 : vector<8x8xf32>
    %c7 = arith.constant 7 : index
    %c0_86 = arith.constant 0 : index
    %c0_87 = arith.constant 0 : index
    %184 = vector.load %arg9[%c7, %c0_86, %c0_87] : memref<8x8x8xf32, #tpu.memory_space<vmem>>, vector<1x8x8xf32>
    %185 = vector.shape_cast %184 : vector<1x8x8xf32> to vector<8x8xf32>
    %186 = vector.shape_cast %183 : vector<8x8xf32> to vector<1x8x8xf32>
    tpu.vector_store %arg9[%c7, %c0_86, %c0_87], %186 {strides = array<i32>} : memref<8x8x8xf32, #tpu.memory_space<vmem>>, vector<1x8x8xf32>,
    %cst_88 = arith.constant dense<0.000000e+00> : vector<8x8xf32>
    %187 = tpu.matmul %183, %172, %cst_88 {dimension_numbers = #tpu.dot_dimension_numbers<[1], [0], [0], [1], [0, 0, 1, 1], [], []>} : vector<8x8xf32>, vector<8x8xf32>, vector<8x8xf32> -> vector<8x8xf32>
    %188 = vector.extract_strided_slice %3 {offsets = [24, 0], sizes = [8, 32], strides = [1, 1]} : vector<32x32xf32> to vector<8x32xf32>
    %cst_89 = arith.constant dense<0.000000e+00> : vector<8x32xf32>
    %189 = tpu.matmul %187, %188, %cst_89 {dimension_numbers = #tpu.dot_dimension_numbers<[1], [0], [0], [1], [0, 0, 1, 1], [], []>} : vector<8x8xf32>, vector<8x32xf32>, vector<8x32xf32> -> vector<8x32xf32>
    %190 = arith.addf %169, %189 : vector<8x32xf32>
    %c1_90 = arith.constant 1 : index
    %c0_91 = arith.constant 0 : index
    %c0_92 = arith.constant 0 : index
    %191 = vector.load %arg8[%c1_90, %c0_91, %c0_92] : memref<2x8x32xf32, #tpu.memory_space<vmem>>, vector<1x8x32xf32>
    %192 = vector.shape_cast %191 : vector<1x8x32xf32> to vector<8x32xf32>
    %193 = vector.shape_cast %190 : vector<8x32xf32> to vector<1x8x32xf32>
    tpu.vector_store %arg8[%c1_90, %c0_91, %c0_92], %193 {strides = array<i32>} : memref<2x8x32xf32, #tpu.memory_space<vmem>>, vector<1x8x32xf32>,
    return
  }
  func.func @transform_0(%arg0: i32) -> (i32, i32, i32) {
    %c0_i32 = arith.constant 0 : i32
    %c0_i32_0 = arith.constant 0 : i32
    %c0_i32_1 = arith.constant 0 : i32
    %c0_i32_2 = arith.constant 0 : i32
    return %c0_i32, %c0_i32_0, %c0_i32_1 : i32, i32, i32
  }
  func.func @transform_1(%arg0: i32) -> (i32, i32, i32) {
    %c0_i32 = arith.constant 0 : i32
    %c0_i32_0 = arith.constant 0 : i32
    %c0_i32_1 = arith.constant 0 : i32
    %c0_i32_2 = arith.constant 0 : i32
    return %c0_i32, %c0_i32_0, %c0_i32_1 : i32, i32, i32
  }
  func.func @transform_2(%arg0: i32) -> (i32, i32, i32) {
    %c0_i32 = arith.constant 0 : i32
    %c0_i32_0 = arith.constant 0 : i32
    %c0_i32_1 = arith.constant 0 : i32
    %c0_i32_2 = arith.constant 0 : i32
    return %c0_i32, %c0_i32_0, %c0_i32_1 : i32, i32, i32
  }
  func.func @transform_3(%arg0: i32) -> (i32, i32) {
    %c0_i32 = arith.constant 0 : i32
    %c0_i32_0 = arith.constant 0 : i32
    %c0_i32_1 = arith.constant 0 : i32
    return %c0_i32, %c0_i32_0 : i32, i32
  }
  func.func @transform_4(%arg0: i32) -> (i32, i32) {
    %c0_i32 = arith.constant 0 : i32
    %c0_i32_0 = arith.constant 0 : i32
    %c0_i32_1 = arith.constant 0 : i32
    return %c0_i32, %c0_i32_0 : i32, i32
  }
  func.func @transform_5(%arg0: i32) -> (i32, i32) {
    %c0_i32 = arith.constant 0 : i32
    %c0_i32_0 = arith.constant 0 : i32
    %c0_i32_1 = arith.constant 0 : i32
    return %c0_i32, %c0_i32_0 : i32, i32
  }
  func.func @transform_6(%arg0: i32) -> (i32, i32) {
    %c0_i32 = arith.constant 0 : i32
    %c0_i32_0 = arith.constant 0 : i32
    %c0_i32_1 = arith.constant 0 : i32
    return %c0_i32, %c0_i32_0 : i32, i32
  }
  func.func @transform_7(%arg0: i32) -> (i32, i32, i32) {
    %c0_i32 = arith.constant 0 : i32
    %c0_i32_0 = arith.constant 0 : i32
    %c0_i32_1 = arith.constant 0 : i32
    %c0_i32_2 = arith.constant 0 : i32
    return %c0_i32, %c0_i32_0, %c0_i32_1 : i32, i32, i32
  }
  func.func @transform_8(%arg0: i32) -> (i32, i32, i32) {
    %c0_i32 = arith.constant 0 : i32
    %c0_i32_0 = arith.constant 0 : i32
    %c0_i32_1 = arith.constant 0 : i32
    %c0_i32_2 = arith.constant 0 : i32
    return %c0_i32, %c0_i32_0, %c0_i32_1 : i32, i32, i32
  }
}

</mosaic_0001>

<llo_original>
// kernel: decomp_mha_forward.1
$region0: #{decomp_mha_forward.1}
  #allocation0 [shape = 'u32[]', space=smem, size = 0x4, offset = 0x4, fixed_abs, tag = 'smem constant byte address 0x4 - core index']
  #allocation1 [shape = 'u32[72,128]{1,0:T(1,128)}', space=vmem, size = 0x9000, scoped, tag = 'internal scratch']
  %s0 = inlined_call_operand.vmem [shape: f32[2,8,32], index: 0, kind: input, shape index: {}]
  %s1 = inlined_call_operand.vmem [shape: f32[2,8,32], index: 1, kind: input, shape index: {}]
  %s2 = inlined_call_operand.vmem [shape: f32[2,8,32], index: 2, kind: input, shape index: {}]
  %s3 = inlined_call_operand.vmem [shape: f32[32,32], index: 3, kind: input, shape index: {}]
  %s4 = inlined_call_operand.vmem [shape: f32[32,32], index: 4, kind: input, shape index: {}]
  %s5 = inlined_call_operand.vmem [shape: f32[32,32], index: 5, kind: input, shape index: {}]
  %s6 = inlined_call_operand.vmem [shape: f32[32,32], index: 6, kind: input, shape index: {}]
  %s7 = inlined_call_operand.vmem [shape: f32[2,8,32], index: 7, kind: output, shape index: {0}]
  %s8 = inlined_call_operand.hbm [shape: f32[8,8,8], index: 8, kind: output, shape index: {1}]
  %9 = xla_tuple %s7, %s8
  %s10 = sld [smem:[#allocation0]]
  $region46: #{decomp_mha_forward.1} parent=0
    _
  %s12 = ssub.s32 1, %s10
  %s13 = scalar_select 0, %s12, %s10
  $region1: #{decomp_mha_forward.1} parent=0
    #allocation2 [shape = 'u8[32768]{0}', space=vmem, size = 0x8000, scoped, tag = 'output window, operand 1, single buffered']
    #allocation3 [shape = 's32[1]{0}', space=sflag, size = 0x4, scoped, tag = 'scoped memory for decomp_mha_forward.1']
    %14 = vsyncpa [#allocation3], 0
    // Predicated region
    $region2: #{decomp_mha_forward.1} parent=1 // pred_check
      _
    $region3: #{decomp_mha_forward.1} parent=1 // pred_check_branch
      %16 = sbr.rel (0) target = $region5
    $region4: #{decomp_mha_forward.1} parent=1 // pred_region
      _
    $region5: #{decomp_mha_forward.1} parent=1 // pred_fallthru
      _
    // Predicated region
    $region6: #{decomp_mha_forward.1} parent=1 // pred_check
      _
    $region7: #{decomp_mha_forward.1} parent=1 // pred_check_branch
      %18 = sbr.rel (0) target = $region9
    $region8: #{decomp_mha_forward.1} parent=1 // pred_region
      _
    $region9: #{decomp_mha_forward.1} parent=1 // pred_fallthru
      _
    // Predicated region
    $region10: #{decomp_mha_forward.1} parent=1 // pred_check
      _
    $region11: #{decomp_mha_forward.1} parent=1 // pred_check_branch
      %20 = sbr.rel (0) target = $region13
    $region12: #{decomp_mha_forward.1} parent=1 // pred_region
      _
    $region13: #{decomp_mha_forward.1} parent=1 // pred_fallthru
      _
    // Predicated region
    $region14: #{decomp_mha_forward.1} parent=1 // pred_check
      _
    $region15: #{decomp_mha_forward.1} parent=1 // pred_check_branch
      %22 = sbr.rel (0) target = $region17
    $region16: #{decomp_mha_forward.1} parent=1 // pred_region
      _
    $region17: #{decomp_mha_forward.1} parent=1 // pred_fallthru
      _
    // Predicated region
    $region18: #{decomp_mha_forward.1} parent=1 // pred_check
      _
    $region19: #{decomp_mha_forward.1} parent=1 // pred_check_branch
      %24 = sbr.rel (0) target = $region21
    $region20: #{decomp_mha_forward.1} parent=1 // pred_region
      _
    $region21: #{decomp_mha_forward.1} parent=1 // pred_fallthru
      _
    // Predicated region
    $region22: #{decomp_mha_forward.1} parent=1 // pred_check
      _
    $region23: #{decomp_mha_forward.1} parent=1 // pred_check_branch
      %26 = sbr.rel (0) target = $region25
    $region24: #{decomp_mha_forward.1} parent=1 // pred_region
      _
    $region25: #{decomp_mha_forward.1} parent=1 // pred_fallthru
      _
    // Predicated region
    $region26: #{decomp_mha_forward.1} parent=1 // pred_check
      _
    $region27: #{decomp_mha_forward.1} parent=1 // pred_check_branch
      %28 = sbr.rel (0) target = $region29
    $region28: #{decomp_mha_forward.1} parent=1 // pred_region
      _
    $region29: #{decomp_mha_forward.1} parent=1 // pred_fallthru
      _
    %v29 = vld [vmem:[%s3] sm:$0xff]
    %v30 = vld [vmem:[%s3 + $0x8] sm:$0xff]
    %v31 = vld [vmem:[%s3 + $0x10] sm:$0xff]
    %v32 = vld [vmem:[%s3 + $0x18] sm:$0xff]
    %v33 = vld [vmem:[%s4] sm:$0xff]
    %v34 = vld [vmem:[%s4 + $0x8] sm:$0xff]
    %v35 = vld [vmem:[%s4 + $0x10] sm:$0xff]
    %v36 = vld [vmem:[%s4 + $0x18] sm:$0xff]
    %v37 = vld [vmem:[%s5] sm:$0xff]
    %v38 = vld [vmem:[%s5 + $0x8] sm:$0xff]
    %v39 = vld [vmem:[%s5 + $0x10] sm:$0xff]
    %v40 = vld [vmem:[%s5 + $0x18] sm:$0xff]
    %v41 = vld [vmem:[%s6] sm:$0xff]
    %v42 = vld [vmem:[%s6 + $0x8] sm:$0xff]
    %v43 = vld [vmem:[%s6 + $0x10] sm:$0xff]
    %v44 = vld [vmem:[%s6 + $0x18] sm:$0xff]
    %v45 = vld [vmem:[%s0] sm:$0xff]
    %v46 = vld [vmem:[%s1] sm:$0xff]
    %v47 = vld [vmem:[%s2] sm:$0xff]
    %vm48 = vcmask 261120
    %v50 = vsel %vm48, %v45, 0
    %52 = vmatpush.msra.mxu0 0.0
    %53 = vmatpush.msra.mxu0 0.0
    %54 = vmatpush.msra.mxu0 0.0
    %55 = vmatpush.msra.mxu0 0.0
    %56 = vmatpush.msra.mxu0 0.0
    %57 = vmatpush.msra.mxu0 0.0
    %58 = vmatpush.msra.mxu0 0.0
    %59 = vmatpush.msra.mxu0 0.0
    %60 = vmatpush.msra.mxu0 0.0
    %61 = vmatpush.msra.mxu0 0.0
    %62 = vmatpush.msra.mxu0 0.0
    %63 = vmatpush.msra.mxu0 0.0
    %64 = vmatpush.msra.mxu0 %v32
    %65 = vmatpush.msra.mxu0 %v31
    %66 = vmatpush.msra.mxu0 %v30
    %67 = vmatpush.msra.mxu0 %v29
    %68 = vmatmul.f32.gmra.mxu0 %v50
    %v69 = vpop.f32.mrf.mxu0
    %v70 = vadd.f32 0.0, %v69
    %71 = vdwg.mxu0
    %v73 = vsel %vm48, %v46, 0
    %75 = vmatpush.msra.mxu0 0.0
    %76 = vmatpush.msra.mxu0 0.0
    %77 = vmatpush.msra.mxu0 0.0
    %78 = vmatpush.msra.mxu0 0.0
    %79 = vmatpush.msra.mxu0 0.0
    %80 = vmatpush.msra.mxu0 0.0
    %81 = vmatpush.msra.mxu0 0.0
    %82 = vmatpush.msra.mxu0 0.0
    %83 = vmatpush.msra.mxu0 0.0
    %84 = vmatpush.msra.mxu0 0.0
    %85 = vmatpush.msra.mxu0 0.0
    %86 = vmatpush.msra.mxu0 0.0
    %87 = vmatpush.msra.mxu0 %v36
    %88 = vmatpush.msra.mxu0 %v35
    %89 = vmatpush.msra.mxu0 %v34
    %90 = vmatpush.msra.mxu0 %v33
    %91 = vmatmul.f32.gmra.mxu0 %v73
    %v92 = vpop.f32.mrf.mxu0
    %v93 = vadd.f32 0.0, %v92
    %94 = vdwg.mxu0
    %v96 = vsel %vm48, %v47, 0
    %98 = vmatpush.msra.mxu0 0.0
    %99 = vmatpush.msra.mxu0 0.0
    %100 = vmatpush.msra.mxu0 0.0
    %101 = vmatpush.msra.mxu0 0.0
    %102 = vmatpush.msra.mxu0 0.0
    %103 = vmatpush.msra.mxu0 0.0
    %104 = vmatpush.msra.mxu0 0.0
    %105 = vmatpush.msra.mxu0 0.0
    %106 = vmatpush.msra.mxu0 0.0
    %107 = vmatpush.msra.mxu0 0.0
    %108 = vmatpush.msra.mxu0 0.0
    %109 = vmatpush.msra.mxu0 0.0
    %110 = vmatpush.msra.mxu0 %v40
    %111 = vmatpush.msra.mxu0 %v39
    %112 = vmatpush.msra.mxu0 %v38
    %113 = vmatpush.msra.mxu0 %v37
    %114 = vmatmul.f32.gmra.mxu0 %v96
    %v115 = vpop.f32.mrf.mxu0
    %v116 = vadd.f32 0.0, %v115
    %117 = vdwg.mxu0
    %vm118 = vcmask 64512
    %v120 = vsel %vm118, %v70, 0
    %v123 = vsel %vm118, %v93, 0
    %125 = vmatpush.xpose.msra.mxu0 0.0
    %126 = vmatpush.xpose.msra.mxu0 0.0
    %127 = vmatpush.xpose.msra.mxu0 0.0
    %128 = vmatpush.xpose.msra.mxu0 0.0
    %129 = vmatpush.xpose.msra.mxu0 0.0
    %130 = vmatpush.xpose.msra.mxu0 0.0
    %131 = vmatpush.xpose.msra.mxu0 0.0
    %132 = vmatpush.xpose.msra.mxu0 0.0
    %133 = vmatpush.xpose.msra.mxu0 0.0
    %134 = vmatpush.xpose.msra.mxu0 0.0
    %135 = vmatpush.xpose.msra.mxu0 0.0
    %136 = vmatpush.xpose.msra.mxu0 0.0
    %137 = vmatpush.xpose.msra.mxu0 0.0
    %138 = vmatpush.xpose.msra.mxu0 0.0
    %139 = vmatpush.xpose.msra.mxu0 0.0
    %140 = vmatpush.xpose.msra.mxu0 %v123
    %141 = vmatmul.f32.gmra.mxu0 %v120
    %v142 = vpop.f32.mrf.mxu0
    %v143 = vadd.f32 0.0, %v142
    %144 = vdwg.mxu0
    %v145 = vsel %vm118, %v143, -inf
    %146 = vmax.xlane.f32.xlu0 %v145
    %v147 = vpop.xlane.xlu0 %146
    %v148 = vsub.f32 %v143, %v147
    %v149 = vmul.f32 %v148, 1.442695
    %v150 = vpow.pop %v149
    %v151 = vsel %vm118, %v150, 0.0
    %152 = vadd.xlane.f32.xlu0 %v151
    %v153 = vpop.xlane.xlu0 %152
    %v154 = vrcp.pop %v153
    %v155 = vmul.f32 %v150, %v154
    %156 = vst.msk [vmem:[#allocation2] sm:$0xff] %vm118, %v155
    %v158 = vsel %vm118, %v155, 0
    %160 = vmatpush.msra.mxu0 0.0
    %161 = vmatpush.msra.mxu0 0.0
    %162 = vmatpush.msra.mxu0 0.0
    %163 = vmatpush.msra.mxu0 0.0
    %164 = vmatpush.msra.mxu0 0.0
    %165 = vmatpush.msra.mxu0 0.0
    %166 = vmatpush.msra.mxu0 0.0
    %167 = vmatpush.msra.mxu0 0.0
    %168 = vmatpush.msra.mxu0 0.0
    %169 = vmatpush.msra.mxu0 0.0
    %170 = vmatpush.msra.mxu0 0.0
    %171 = vmatpush.msra.mxu0 0.0
    %172 = vmatpush.msra.mxu0 0.0
    %173 = vmatpush.msra.mxu0 0.0
    %174 = vmatpush.msra.mxu0 0.0
    %175 = vmatpush.msra.mxu0 %v116
    %176 = vmatmul.f32.gmra.mxu0 %v158
    %v177 = vpop.f32.mrf.mxu0
    %v178 = vadd.f32 0.0, %v177
    %179 = vdwg.mxu0
    %180 = vrot.lane.b32.xlu0 %v70, 120
    %v181 = vpop.permute.xlu0 %180
    %182 = vrot.lane.b32.xlu0 %v93, 120
    %v183 = vpop.permute.xlu0 %182
    %v184 = vsel %vm118, %v181, 0
    %v186 = vsel %vm118, %v183, 0
    %188 = vmatpush.xpose.msra.mxu0 0.0
    %189 = vmatpush.xpose.msra.mxu0 0.0
    %190 = vmatpush.xpose.msra.mxu0 0.0
    %191 = vmatpush.xpose.msra.mxu0 0.0
    %192 = vmatpush.xpose.msra.mxu0 0.0
    %193 = vmatpush.xpose.msra.mxu0 0.0
    %194 = vmatpush.xpose.msra.mxu0 0.0
    %195 = vmatpush.xpose.msra.mxu0 0.0
    %196 = vmatpush.xpose.msra.mxu0 0.0
    %197 = vmatpush.xpose.msra.mxu0 0.0
    %198 = vmatpush.xpose.msra.mxu0 0.0
    %199 = vmatpush.xpose.msra.mxu0 0.0
    %200 = vmatpush.xpose.msra.mxu0 0.0
    %201 = vmatpush.xpose.msra.mxu0 0.0
    %202 = vmatpush.xpose.msra.mxu0 0.0
    %203 = vmatpush.xpose.msra.mxu0 %v186
    %204 = vmatmul.f32.gmra.mxu0 %v184
    %v205 = vpop.f32.mrf.mxu0
    %v206 = vadd.f32 0.0, %v205
    %207 = vdwg.mxu0
    %v208 = vsel %vm118, %v206, -inf
    %209 = vmax.xlane.f32.xlu0 %v208
    %v210 = vpop.xlane.xlu0 %209
    %v211 = vsub.f32 %v206, %v210
    %v212 = vmul.f32 %v211, 1.442695
    %v213 = vpow.pop %v212
    %v214 = vsel %vm118, %v213, 0.0
    %215 = vadd.xlane.f32.xlu0 %v214
    %v216 = vpop.xlane.xlu0 %215
    %v217 = vrcp.pop %v216
    %v218 = vmul.f32 %v213, %v217
    %s219 = scalar_lea.vmem [#allocation2], 8
    %220 = vst.msk [vmem:[%s219] sm:$0xff] %vm118, %v218
    %222 = vrot.lane.b32.xlu0 %v116, 120
    %v223 = vpop.permute.xlu0 %222
    %v226 = vsel %vm118, %v218, 0
    %228 = vmatpush.msra.mxu0 0.0
    %229 = vmatpush.msra.mxu0 0.0
    %230 = vmatpush.msra.mxu0 0.0
    %231 = vmatpush.msra.mxu0 0.0
    %232 = vmatpush.msra.mxu0 0.0
    %233 = vmatpush.msra.mxu0 0.0
    %234 = vmatpush.msra.mxu0 0.0
    %235 = vmatpush.msra.mxu0 0.0
    %236 = vmatpush.msra.mxu0 0.0
    %237 = vmatpush.msra.mxu0 0.0
    %238 = vmatpush.msra.mxu0 0.0
    %239 = vmatpush.msra.mxu0 0.0
    %240 = vmatpush.msra.mxu0 0.0
    %241 = vmatpush.msra.mxu0 0.0
    %242 = vmatpush.msra.mxu0 0.0
    %243 = vmatpush.msra.mxu0 %v223
    %244 = vmatmul.f32.gmra.mxu0 %v226
    %v245 = vpop.f32.mrf.mxu0
    %v246 = vadd.f32 0.0, %v245
    %247 = vdwg.mxu0
    %v249 = vsel %vm118, %v246, 0
    %251 = vmatpush.msra.mxu0 0.0
    %252 = vmatpush.msra.mxu0 0.0
    %253 = vmatpush.msra.mxu0 0.0
    %254 = vmatpush.msra.mxu0 0.0
    %255 = vmatpush.msra.mxu0 0.0
    %256 = vmatpush.msra.mxu0 0.0
    %257 = vmatpush.msra.mxu0 0.0
    %258 = vmatpush.msra.mxu0 0.0
    %259 = vmatpush.msra.mxu0 0.0
    %260 = vmatpush.msra.mxu0 0.0
    %261 = vmatpush.msra.mxu0 0.0
    %262 = vmatpush.msra.mxu0 0.0
    %263 = vmatpush.msra.mxu0 0.0
    %264 = vmatpush.msra.mxu0 0.0
    %265 = vmatpush.msra.mxu0 0.0
    %266 = vmatpush.msra.mxu0 %v42
    %267 = vmatmul.f32.gmra.mxu0 %v249
    %v268 = vpop.f32.mrf.mxu0
    %v269 = vadd.f32 0.0, %v268
    %270 = vdwg.mxu0
    %v272 = vsel %vm118, %v178, 0
    %274 = vmatpush.msra.mxu0 0.0
    %275 = vmatpush.msra.mxu0 0.0
    %276 = vmatpush.msra.mxu0 0.0
    %277 = vmatpush.msra.mxu0 0.0
    %278 = vmatpush.msra.mxu0 0.0
    %279 = vmatpush.msra.mxu0 0.0
    %280 = vmatpush.msra.mxu0 0.0
    %281 = vmatpush.msra.mxu0 0.0
    %282 = vmatpush.msra.mxu0 0.0
    %283 = vmatpush.msra.mxu0 0.0
    %284 = vmatpush.msra.mxu0 0.0
    %285 = vmatpush.msra.mxu0 0.0
    %286 = vmatpush.msra.mxu0 0.0
    %287 = vmatpush.msra.mxu0 0.0
    %288 = vmatpush.msra.mxu0 0.0
    %289 = vmatpush.msra.mxu0 %v41
    %290 = vmatmul.f32.gmra.mxu0 %v272
    %v291 = vpop.f32.mrf.mxu0
    %v292 = vadd.f32 %v269, %v291
    %293 = vdwg.mxu0
    %294 = vrot.lane.b32.xlu0 %v70, 112
    %v295 = vpop.permute.xlu0 %294
    %296 = vrot.lane.b32.xlu0 %v93, 112
    %v297 = vpop.permute.xlu0 %296
    %v298 = vsel %vm118, %v295, 0
    %v300 = vsel %vm118, %v297, 0
    %302 = vmatpush.xpose.msra.mxu0 0.0
    %303 = vmatpush.xpose.msra.mxu0 0.0
    %304 = vmatpush.xpose.msra.mxu0 0.0
    %305 = vmatpush.xpose.msra.mxu0 0.0
    %306 = vmatpush.xpose.msra.mxu0 0.0
    %307 = vmatpush.xpose.msra.mxu0 0.0
    %308 = vmatpush.xpose.msra.mxu0 0.0
    %309 = vmatpush.xpose.msra.mxu0 0.0
    %310 = vmatpush.xpose.msra.mxu0 0.0
    %311 = vmatpush.xpose.msra.mxu0 0.0
    %312 = vmatpush.xpose.msra.mxu0 0.0
    %313 = vmatpush.xpose.msra.mxu0 0.0
    %314 = vmatpush.xpose.msra.mxu0 0.0
    %315 = vmatpush.xpose.msra.mxu0 0.0
    %316 = vmatpush.xpose.msra.mxu0 0.0
    %317 = vmatpush.xpose.msra.mxu0 %v300
    %318 = vmatmul.f32.gmra.mxu0 %v298
    %v319 = vpop.f32.mrf.mxu0
    %v320 = vadd.f32 0.0, %v319
    %321 = vdwg.mxu0
    %v322 = vsel %vm118, %v320, -inf
    %323 = vmax.xlane.f32.xlu0 %v322
    %v324 = vpop.xlane.xlu0 %323
    %v325 = vsub.f32 %v320, %v324
    %v326 = vmul.f32 %v325, 1.442695
    %v327 = vpow.pop %v326
    %v328 = vsel %vm118, %v327, 0.0
    %329 = vadd.xlane.f32.xlu0 %v328
    %v330 = vpop.xlane.xlu0 %329
    %v331 = vrcp.pop %v330
    %v332 = vmul.f32 %v327, %v331
    %s333 = scalar_lea.vmem [#allocation2], 16
    %334 = vst.msk [vmem:[%s333] sm:$0xff] %vm118, %v332
    %335 = vrot.lane.b32.xlu0 %v116, 112
    %v336 = vpop.permute.xlu0 %335
    %v339 = vsel %vm118, %v332, 0
    %341 = vmatpush.msra.mxu0 0.0
    %342 = vmatpush.msra.mxu0 0.0
    %343 = vmatpush.msra.mxu0 0.0
    %344 = vmatpush.msra.mxu0 0.0
    %345 = vmatpush.msra.mxu0 0.0
    %346 = vmatpush.msra.mxu0 0.0
    %347 = vmatpush.msra.mxu0 0.0
    %348 = vmatpush.msra.mxu0 0.0
    %349 = vmatpush.msra.mxu0 0.0
    %350 = vmatpush.msra.mxu0 0.0
    %351 = vmatpush.msra.mxu0 0.0
    %352 = vmatpush.msra.mxu0 0.0
    %353 = vmatpush.msra.mxu0 0.0
    %354 = vmatpush.msra.mxu0 0.0
    %355 = vmatpush.msra.mxu0 0.0
    %356 = vmatpush.msra.mxu0 %v336
    %357 = vmatmul.f32.gmra.mxu0 %v339
    %v358 = vpop.f32.mrf.mxu0
    %v359 = vadd.f32 0.0, %v358
    %360 = vdwg.mxu0
    %v362 = vsel %vm118, %v359, 0
    %364 = vmatpush.msra.mxu0 0.0
    %365 = vmatpush.msra.mxu0 0.0
    %366 = vmatpush.msra.mxu0 0.0
    %367 = vmatpush.msra.mxu0 0.0
    %368 = vmatpush.msra.mxu0 0.0
    %369 = vmatpush.msra.mxu0 0.0
    %370 = vmatpush.msra.mxu0 0.0
    %371 = vmatpush.msra.mxu0 0.0
    %372 = vmatpush.msra.mxu0 0.0
    %373 = vmatpush.msra.mxu0 0.0
    %374 = vmatpush.msra.mxu0 0.0
    %375 = vmatpush.msra.mxu0 0.0
    %376 = vmatpush.msra.mxu0 0.0
    %377 = vmatpush.msra.mxu0 0.0
    %378 = vmatpush.msra.mxu0 0.0
    %379 = vmatpush.msra.mxu0 %v43
    %380 = vmatmul.f32.gmra.mxu0 %v362
    %v381 = vpop.f32.mrf.mxu0
    %v382 = vadd.f32 0.0, %v381
    %383 = vdwg.mxu0
    %v384 = vadd.f32 %v292, %v382
    %385 = vrot.lane.b32.xlu0 %v70, 104
    %v386 = vpop.permute.xlu0 %385
    %387 = vrot.lane.b32.xlu0 %v93, 104
    %v388 = vpop.permute.xlu0 %387
    %v389 = vsel %vm118, %v386, 0
    %v391 = vsel %vm118, %v388, 0
    %393 = vmatpush.xpose.msra.mxu0 0.0
    %394 = vmatpush.xpose.msra.mxu0 0.0
    %395 = vmatpush.xpose.msra.mxu0 0.0
    %396 = vmatpush.xpose.msra.mxu0 0.0
    %397 = vmatpush.xpose.msra.mxu0 0.0
    %398 = vmatpush.xpose.msra.mxu0 0.0
    %399 = vmatpush.xpose.msra.mxu0 0.0
    %400 = vmatpush.xpose.msra.mxu0 0.0
    %401 = vmatpush.xpose.msra.mxu0 0.0
    %402 = vmatpush.xpose.msra.mxu0 0.0
    %403 = vmatpush.xpose.msra.mxu0 0.0
    %404 = vmatpush.xpose.msra.mxu0 0.0
    %405 = vmatpush.xpose.msra.mxu0 0.0
    %406 = vmatpush.xpose.msra.mxu0 0.0
    %407 = vmatpush.xpose.msra.mxu0 0.0
    %408 = vmatpush.xpose.msra.mxu0 %v391
    %409 = vmatmul.f32.gmra.mxu0 %v389
    %v410 = vpop.f32.mrf.mxu0
    %v411 = vadd.f32 0.0, %v410
    %412 = vdwg.mxu0
    %v413 = vsel %vm118, %v411, -inf
    %414 = vmax.xlane.f32.xlu0 %v413
    %v415 = vpop.xlane.xlu0 %414
    %v416 = vsub.f32 %v411, %v415
    %v417 = vmul.f32 %v416, 1.442695
    %v418 = vpow.pop %v417
    %v419 = vsel %vm118, %v418, 0.0
    %420 = vadd.xlane.f32.xlu0 %v419
    %v421 = vpop.xlane.xlu0 %420
    %v422 = vrcp.pop %v421
    %v423 = vmul.f32 %v418, %v422
    %s424 = scalar_lea.vmem [#allocation2], 24
    %425 = vst.msk [vmem:[%s424] sm:$0xff] %vm118, %v423
    %426 = vrot.lane.b32.xlu0 %v116, 104
    %v427 = vpop.permute.xlu0 %426
    %v430 = vsel %vm118, %v423, 0
    %432 = vmatpush.msra.mxu0 0.0
    %433 = vmatpush.msra.mxu0 0.0
    %434 = vmatpush.msra.mxu0 0.0
    %435 = vmatpush.msra.mxu0 0.0
    %436 = vmatpush.msra.mxu0 0.0
    %437 = vmatpush.msra.mxu0 0.0
    %438 = vmatpush.msra.mxu0 0.0
    %439 = vmatpush.msra.mxu0 0.0
    %440 = vmatpush.msra.mxu0 0.0
    %441 = vmatpush.msra.mxu0 0.0
    %442 = vmatpush.msra.mxu0 0.0
    %443 = vmatpush.msra.mxu0 0.0
    %444 = vmatpush.msra.mxu0 0.0
    %445 = vmatpush.msra.mxu0 0.0
    %446 = vmatpush.msra.mxu0 0.0
    %447 = vmatpush.msra.mxu0 %v427
    %448 = vmatmul.f32.gmra.mxu0 %v430
    %v449 = vpop.f32.mrf.mxu0
    %v450 = vadd.f32 0.0, %v449
    %451 = vdwg.mxu0
    %v453 = vsel %vm118, %v450, 0
    %455 = vmatpush.msra.mxu0 0.0
    %456 = vmatpush.msra.mxu0 0.0
    %457 = vmatpush.msra.mxu0 0.0
    %458 = vmatpush.msra.mxu0 0.0
    %459 = vmatpush.msra.mxu0 0.0
    %460 = vmatpush.msra.mxu0 0.0
    %461 = vmatpush.msra.mxu0 0.0
    %462 = vmatpush.msra.mxu0 0.0
    %463 = vmatpush.msra.mxu0 0.0
    %464 = vmatpush.msra.mxu0 0.0
    %465 = vmatpush.msra.mxu0 0.0
    %466 = vmatpush.msra.mxu0 0.0
    %467 = vmatpush.msra.mxu0 0.0
    %468 = vmatpush.msra.mxu0 0.0
    %469 = vmatpush.msra.mxu0 0.0
    %470 = vmatpush.msra.mxu0 %v44
    %471 = vmatmul.f32.gmra.mxu0 %v453
    %v472 = vpop.f32.mrf.mxu0
    %v473 = vadd.f32 0.0, %v472
    %474 = vdwg.mxu0
    %v475 = vadd.f32 %v384, %v473
    %476 = vst.msk [vmem:[%s7] sm:$0xff] %vm48, %v475
    %s477 = scalar_lea.vmem %s0, 8
    %v478 = vld [vmem:[%s477] sm:$0xff]
    %s479 = scalar_lea.vmem %s1, 8
    %v480 = vld [vmem:[%s479] sm:$0xff]
    %s481 = scalar_lea.vmem %s2, 8
    %v482 = vld [vmem:[%s481] sm:$0xff]
    %v484 = vsel %vm48, %v478, 0
    %486 = vmatpush.msra.mxu0 0.0
    %487 = vmatpush.msra.mxu0 0.0
    %488 = vmatpush.msra.mxu0 0.0
    %489 = vmatpush.msra.mxu0 0.0
    %490 = vmatpush.msra.mxu0 0.0
    %491 = vmatpush.msra.mxu0 0.0
    %492 = vmatpush.msra.mxu0 0.0
    %493 = vmatpush.msra.mxu0 0.0
    %494 = vmatpush.msra.mxu0 0.0
    %495 = vmatpush.msra.mxu0 0.0
    %496 = vmatpush.msra.mxu0 0.0
    %497 = vmatpush.msra.mxu0 0.0
    %498 = vmatpush.msra.mxu0 %v32
    %499 = vmatpush.msra.mxu0 %v31
    %500 = vmatpush.msra.mxu0 %v30
    %501 = vmatpush.msra.mxu0 %v29
    %502 = vmatmul.f32.gmra.mxu0 %v484
    %v503 = vpop.f32.mrf.mxu0
    %v504 = vadd.f32 0.0, %v503
    %505 = vdwg.mxu0
    %v507 = vsel %vm48, %v480, 0
    %509 = vmatpush.msra.mxu0 0.0
    %510 = vmatpush.msra.mxu0 0.0
    %511 = vmatpush.msra.mxu0 0.0
    %512 = vmatpush.msra.mxu0 0.0
    %513 = vmatpush.msra.mxu0 0.0
    %514 = vmatpush.msra.mxu0 0.0
    %515 = vmatpush.msra.mxu0 0.0
    %516 = vmatpush.msra.mxu0 0.0
    %517 = vmatpush.msra.mxu0 0.0
    %518 = vmatpush.msra.mxu0 0.0
    %519 = vmatpush.msra.mxu0 0.0
    %520 = vmatpush.msra.mxu0 0.0
    %521 = vmatpush.msra.mxu0 %v36
    %522 = vmatpush.msra.mxu0 %v35
    %523 = vmatpush.msra.mxu0 %v34
    %524 = vmatpush.msra.mxu0 %v33
    %525 = vmatmul.f32.gmra.mxu0 %v507
    %v526 = vpop.f32.mrf.mxu0
    %v527 = vadd.f32 0.0, %v526
    %528 = vdwg.mxu0
    %v530 = vsel %vm48, %v482, 0
    %532 = vmatpush.msra.mxu0 0.0
    %533 = vmatpush.msra.mxu0 0.0
    %534 = vmatpush.msra.mxu0 0.0
    %535 = vmatpush.msra.mxu0 0.0
    %536 = vmatpush.msra.mxu0 0.0
    %537 = vmatpush.msra.mxu0 0.0
    %538 = vmatpush.msra.mxu0 0.0
    %539 = vmatpush.msra.mxu0 0.0
    %540 = vmatpush.msra.mxu0 0.0
    %541 = vmatpush.msra.mxu0 0.0
    %542 = vmatpush.msra.mxu0 0.0
    %543 = vmatpush.msra.mxu0 0.0
    %544 = vmatpush.msra.mxu0 %v40
    %545 = vmatpush.msra.mxu0 %v39
    %546 = vmatpush.msra.mxu0 %v38
    %547 = vmatpush.msra.mxu0 %v37
    %548 = vmatmul.f32.gmra.mxu0 %v530
    %v549 = vpop.f32.mrf.mxu0
    %v550 = vadd.f32 0.0, %v549
    %551 = vdwg.mxu0
    %v553 = vsel %vm118, %v504, 0
    %v556 = vsel %vm118, %v527, 0
    %558 = vmatpush.xpose.msra.mxu0 0.0
    %559 = vmatpush.xpose.msra.mxu0 0.0
    %560 = vmatpush.xpose.msra.mxu0 0.0
    %561 = vmatpush.xpose.msra.mxu0 0.0
    %562 = vmatpush.xpose.msra.mxu0 0.0
    %563 = vmatpush.xpose.msra.mxu0 0.0
    %564 = vmatpush.xpose.msra.mxu0 0.0
    %565 = vmatpush.xpose.msra.mxu0 0.0
    %566 = vmatpush.xpose.msra.mxu0 0.0
    %567 = vmatpush.xpose.msra.mxu0 0.0
    %568 = vmatpush.xpose.msra.mxu0 0.0
    %569 = vmatpush.xpose.msra.mxu0 0.0
    %570 = vmatpush.xpose.msra.mxu0 0.0
    %571 = vmatpush.xpose.msra.mxu0 0.0
    %572 = vmatpush.xpose.msra.mxu0 0.0
    %573 = vmatpush.xpose.msra.mxu0 %v556
    %574 = vmatmul.f32.gmra.mxu0 %v553
    %v575 = vpop.f32.mrf.mxu0
    %v576 = vadd.f32 0.0, %v575
    %577 = vdwg.mxu0
    %v578 = vsel %vm118, %v576, -inf
    %579 = vmax.xlane.f32.xlu0 %v578
    %v580 = vpop.xlane.xlu0 %579
    %v581 = vsub.f32 %v576, %v580
    %v582 = vmul.f32 %v581, 1.442695
    %v583 = vpow.pop %v582
    %v584 = vsel %vm118, %v583, 0.0
    %585 = vadd.xlane.f32.xlu0 %v584
    %v586 = vpop.xlane.xlu0 %585
    %v587 = vrcp.pop %v586
    %v588 = vmul.f32 %v583, %v587
    %s589 = scalar_lea.vmem [#allocation2], 32
    %590 = vst.msk [vmem:[%s589] sm:$0xff] %vm118, %v588
    %v592 = vsel %vm118, %v588, 0
    %594 = vmatpush.msra.mxu0 0.0
    %595 = vmatpush.msra.mxu0 0.0
    %596 = vmatpush.msra.mxu0 0.0
    %597 = vmatpush.msra.mxu0 0.0
    %598 = vmatpush.msra.mxu0 0.0
    %599 = vmatpush.msra.mxu0 0.0
    %600 = vmatpush.msra.mxu0 0.0
    %601 = vmatpush.msra.mxu0 0.0
    %602 = vmatpush.msra.mxu0 0.0
    %603 = vmatpush.msra.mxu0 0.0
    %604 = vmatpush.msra.mxu0 0.0
    %605 = vmatpush.msra.mxu0 0.0
    %606 = vmatpush.msra.mxu0 0.0
    %607 = vmatpush.msra.mxu0 0.0
    %608 = vmatpush.msra.mxu0 0.0
    %609 = vmatpush.msra.mxu0 %v550
    %610 = vmatmul.f32.gmra.mxu0 %v592
    %v611 = vpop.f32.mrf.mxu0
    %v612 = vadd.f32 0.0, %v611
    %613 = vdwg.mxu0
    %614 = vrot.lane.b32.xlu0 %v504, 120
    %v615 = vpop.permute.xlu0 %614
    %616 = vrot.lane.b32.xlu0 %v527, 120
    %v617 = vpop.permute.xlu0 %616
    %v618 = vsel %vm118, %v615, 0
    %v620 = vsel %vm118, %v617, 0
    %622 = vmatpush.xpose.msra.mxu0 0.0
    %623 = vmatpush.xpose.msra.mxu0 0.0
    %624 = vmatpush.xpose.msra.mxu0 0.0
    %625 = vmatpush.xpose.msra.mxu0 0.0
    %626 = vmatpush.xpose.msra.mxu0 0.0
    %627 = vmatpush.xpose.msra.mxu0 0.0
    %628 = vmatpush.xpose.msra.mxu0 0.0
    %629 = vmatpush.xpose.msra.mxu0 0.0
    %630 = vmatpush.xpose.msra.mxu0 0.0
    %631 = vmatpush.xpose.msra.mxu0 0.0
    %632 = vmatpush.xpose.msra.mxu0 0.0
    %633 = vmatpush.xpose.msra.mxu0 0.0
    %634 = vmatpush.xpose.msra.mxu0 0.0
    %635 = vmatpush.xpose.msra.mxu0 0.0
    %636 = vmatpush.xpose.msra.mxu0 0.0
    %637 = vmatpush.xpose.msra.mxu0 %v620
    %638 = vmatmul.f32.gmra.mxu0 %v618
    %v639 = vpop.f32.mrf.mxu0
    %v640 = vadd.f32 0.0, %v639
    %641 = vdwg.mxu0
    %v642 = vsel %vm118, %v640, -inf
    %643 = vmax.xlane.f32.xlu0 %v642
    %v644 = vpop.xlane.xlu0 %643
    %v645 = vsub.f32 %v640, %v644
    %v646 = vmul.f32 %v645, 1.442695
    %v647 = vpow.pop %v646
    %v648 = vsel %vm118, %v647, 0.0
    %649 = vadd.xlane.f32.xlu0 %v648
    %v650 = vpop.xlane.xlu0 %649
    %v651 = vrcp.pop %v650
    %v652 = vmul.f32 %v647, %v651
    %s653 = scalar_lea.vmem [#allocation2], 40
    %654 = vst.msk [vmem:[%s653] sm:$0xff] %vm118, %v652
    %656 = vrot.lane.b32.xlu0 %v550, 120
    %v657 = vpop.permute.xlu0 %656
    %v660 = vsel %vm118, %v652, 0
    %662 = vmatpush.msra.mxu0 0.0
    %663 = vmatpush.msra.mxu0 0.0
    %664 = vmatpush.msra.mxu0 0.0
    %665 = vmatpush.msra.mxu0 0.0
    %666 = vmatpush.msra.mxu0 0.0
    %667 = vmatpush.msra.mxu0 0.0
    %668 = vmatpush.msra.mxu0 0.0
    %669 = vmatpush.msra.mxu0 0.0
    %670 = vmatpush.msra.mxu0 0.0
    %671 = vmatpush.msra.mxu0 0.0
    %672 = vmatpush.msra.mxu0 0.0
    %673 = vmatpush.msra.mxu0 0.0
    %674 = vmatpush.msra.mxu0 0.0
    %675 = vmatpush.msra.mxu0 0.0
    %676 = vmatpush.msra.mxu0 0.0
    %677 = vmatpush.msra.mxu0 %v657
    %678 = vmatmul.f32.gmra.mxu0 %v660
    %v679 = vpop.f32.mrf.mxu0
    %v680 = vadd.f32 0.0, %v679
    %681 = vdwg.mxu0
    %v683 = vsel %vm118, %v680, 0
    %685 = vmatpush.msra.mxu0 0.0
    %686 = vmatpush.msra.mxu0 0.0
    %687 = vmatpush.msra.mxu0 0.0
    %688 = vmatpush.msra.mxu0 0.0
    %689 = vmatpush.msra.mxu0 0.0
    %690 = vmatpush.msra.mxu0 0.0
    %691 = vmatpush.msra.mxu0 0.0
    %692 = vmatpush.msra.mxu0 0.0
    %693 = vmatpush.msra.mxu0 0.0
    %694 = vmatpush.msra.mxu0 0.0
    %695 = vmatpush.msra.mxu0 0.0
    %696 = vmatpush.msra.mxu0 0.0
    %697 = vmatpush.msra.mxu0 0.0
    %698 = vmatpush.msra.mxu0 0.0
    %699 = vmatpush.msra.mxu0 0.0
    %700 = vmatpush.msra.mxu0 %v42
    %701 = vmatmul.f32.gmra.mxu0 %v683
    %v702 = vpop.f32.mrf.mxu0
    %v703 = vadd.f32 0.0, %v702
    %704 = vdwg.mxu0
    %v706 = vsel %vm118, %v612, 0
    %708 = vmatpush.msra.mxu0 0.0
    %709 = vmatpush.msra.mxu0 0.0
    %710 = vmatpush.msra.mxu0 0.0
    %711 = vmatpush.msra.mxu0 0.0
    %712 = vmatpush.msra.mxu0 0.0
    %713 = vmatpush.msra.mxu0 0.0
    %714 = vmatpush.msra.mxu0 0.0
    %715 = vmatpush.msra.mxu0 0.0
    %716 = vmatpush.msra.mxu0 0.0
    %717 = vmatpush.msra.mxu0 0.0
    %718 = vmatpush.msra.mxu0 0.0
    %719 = vmatpush.msra.mxu0 0.0
    %720 = vmatpush.msra.mxu0 0.0
    %721 = vmatpush.msra.mxu0 0.0
    %722 = vmatpush.msra.mxu0 0.0
    %723 = vmatpush.msra.mxu0 %v41
    %724 = vmatmul.f32.gmra.mxu0 %v706
    %v725 = vpop.f32.mrf.mxu0
    %v726 = vadd.f32 %v703, %v725
    %727 = vdwg.mxu0
    %728 = vrot.lane.b32.xlu0 %v504, 112
    %v729 = vpop.permute.xlu0 %728
    %730 = vrot.lane.b32.xlu0 %v527, 112
    %v731 = vpop.permute.xlu0 %730
    %v732 = vsel %vm118, %v729, 0
    %v734 = vsel %vm118, %v731, 0
    %736 = vmatpush.xpose.msra.mxu0 0.0
    %737 = vmatpush.xpose.msra.mxu0 0.0
    %738 = vmatpush.xpose.msra.mxu0 0.0
    %739 = vmatpush.xpose.msra.mxu0 0.0
    %740 = vmatpush.xpose.msra.mxu0 0.0
    %741 = vmatpush.xpose.msra.mxu0 0.0
    %742 = vmatpush.xpose.msra.mxu0 0.0
    %743 = vmatpush.xpose.msra.mxu0 0.0
    %744 = vmatpush.xpose.msra.mxu0 0.0
    %745 = vmatpush.xpose.msra.mxu0 0.0
    %746 = vmatpush.xpose.msra.mxu0 0.0
    %747 = vmatpush.xpose.msra.mxu0 0.0
    %748 = vmatpush.xpose.msra.mxu0 0.0
    %749 = vmatpush.xpose.msra.mxu0 0.0
    %750 = vmatpush.xpose.msra.mxu0 0.0
    %751 = vmatpush.xpose.msra.mxu0 %v734
    %752 = vmatmul.f32.gmra.mxu0 %v732
    %v753 = vpop.f32.mrf.mxu0
    %v754 = vadd.f32 0.0, %v753
    %755 = vdwg.mxu0
    %v756 = vsel %vm118, %v754, -inf
    %757 = vmax.xlane.f32.xlu0 %v756
    %v758 = vpop.xlane.xlu0 %757
    %v759 = vsub.f32 %v754, %v758
    %v760 = vmul.f32 %v759, 1.442695
    %v761 = vpow.pop %v760
    %v762 = vsel %vm118, %v761, 0.0
    %763 = vadd.xlane.f32.xlu0 %v762
    %v764 = vpop.xlane.xlu0 %763
    %v765 = vrcp.pop %v764
    %v766 = vmul.f32 %v761, %v765
    %s767 = scalar_lea.vmem [#allocation2], 48
    %768 = vst.msk [vmem:[%s767] sm:$0xff] %vm118, %v766
    %769 = vrot.lane.b32.xlu0 %v550, 112
    %v770 = vpop.permute.xlu0 %769
    %v773 = vsel %vm118, %v766, 0
    %775 = vmatpush.msra.mxu0 0.0
    %776 = vmatpush.msra.mxu0 0.0
    %777 = vmatpush.msra.mxu0 0.0
    %778 = vmatpush.msra.mxu0 0.0
    %779 = vmatpush.msra.mxu0 0.0
    %780 = vmatpush.msra.mxu0 0.0
    %781 = vmatpush.msra.mxu0 0.0
    %782 = vmatpush.msra.mxu0 0.0
    %783 = vmatpush.msra.mxu0 0.0
    %784 = vmatpush.msra.mxu0 0.0
    %785 = vmatpush.msra.mxu0 0.0
    %786 = vmatpush.msra.mxu0 0.0
    %787 = vmatpush.msra.mxu0 0.0
    %788 = vmatpush.msra.mxu0 0.0
    %789 = vmatpush.msra.mxu0 0.0
    %790 = vmatpush.msra.mxu0 %v770
    %791 = vmatmul.f32.gmra.mxu0 %v773
    %v792 = vpop.f32.mrf.mxu0
    %v793 = vadd.f32 0.0, %v792
    %794 = vdwg.mxu0
    %v796 = vsel %vm118, %v793, 0
    %798 = vmatpush.msra.mxu0 0.0
    %799 = vmatpush.msra.mxu0 0.0
    %800 = vmatpush.msra.mxu0 0.0
    %801 = vmatpush.msra.mxu0 0.0
    %802 = vmatpush.msra.mxu0 0.0
    %803 = vmatpush.msra.mxu0 0.0
    %804 = vmatpush.msra.mxu0 0.0
    %805 = vmatpush.msra.mxu0 0.0
    %806 = vmatpush.msra.mxu0 0.0
    %807 = vmatpush.msra.mxu0 0.0
    %808 = vmatpush.msra.mxu0 0.0
    %809 = vmatpush.msra.mxu0 0.0
    %810 = vmatpush.msra.mxu0 0.0
    %811 = vmatpush.msra.mxu0 0.0
    %812 = vmatpush.msra.mxu0 0.0
    %813 = vmatpush.msra.mxu0 %v43
    %814 = vmatmul.f32.gmra.mxu0 %v796
    %v815 = vpop.f32.mrf.mxu0
    %v816 = vadd.f32 0.0, %v815
    %817 = vdwg.mxu0
    %v818 = vadd.f32 %v726, %v816
    %819 = vrot.lane.b32.xlu0 %v504, 104
    %v820 = vpop.permute.xlu0 %819
    %821 = vrot.lane.b32.xlu0 %v527, 104
    %v822 = vpop.permute.xlu0 %821
    %v823 = vsel %vm118, %v820, 0
    %v825 = vsel %vm118, %v822, 0
    %827 = vmatpush.xpose.msra.mxu0 0.0
    %828 = vmatpush.xpose.msra.mxu0 0.0
    %829 = vmatpush.xpose.msra.mxu0 0.0
    %830 = vmatpush.xpose.msra.mxu0 0.0
    %831 = vmatpush.xpose.msra.mxu0 0.0
    %832 = vmatpush.xpose.msra.mxu0 0.0
    %833 = vmatpush.xpose.msra.mxu0 0.0
    %834 = vmatpush.xpose.msra.mxu0 0.0
    %835 = vmatpush.xpose.msra.mxu0 0.0
    %836 = vmatpush.xpose.msra.mxu0 0.0
    %837 = vmatpush.xpose.msra.mxu0 0.0
    %838 = vmatpush.xpose.msra.mxu0 0.0
    %839 = vmatpush.xpose.msra.mxu0 0.0
    %840 = vmatpush.xpose.msra.mxu0 0.0
    %841 = vmatpush.xpose.msra.mxu0 0.0
    %842 = vmatpush.xpose.msra.mxu0 %v825
    %843 = vmatmul.f32.gmra.mxu0 %v823
    %v844 = vpop.f32.mrf.mxu0
    %v845 = vadd.f32 0.0, %v844
    %846 = vdwg.mxu0
    %v847 = vsel %vm118, %v845, -inf
    %848 = vmax.xlane.f32.xlu0 %v847
    %v849 = vpop.xlane.xlu0 %848
    %v850 = vsub.f32 %v845, %v849
    %v851 = vmul.f32 %v850, 1.442695
    %v852 = vpow.pop %v851
    %v853 = vsel %vm118, %v852, 0.0
    %854 = vadd.xlane.f32.xlu0 %v853
    %v855 = vpop.xlane.xlu0 %854
    %v856 = vrcp.pop %v855
    %v857 = vmul.f32 %v852, %v856
    %s858 = scalar_lea.vmem [#allocation2], 56
    %859 = vst.msk [vmem:[%s858] sm:$0xff] %vm118, %v857
    %860 = vrot.lane.b32.xlu0 %v550, 104
    %v861 = vpop.permute.xlu0 %860
    %v864 = vsel %vm118, %v857, 0
    %866 = vmatpush.msra.mxu0 0.0
    %867 = vmatpush.msra.mxu0 0.0
    %868 = vmatpush.msra.mxu0 0.0
    %869 = vmatpush.msra.mxu0 0.0
    %870 = vmatpush.msra.mxu0 0.0
    %871 = vmatpush.msra.mxu0 0.0
    %872 = vmatpush.msra.mxu0 0.0
    %873 = vmatpush.msra.mxu0 0.0
    %874 = vmatpush.msra.mxu0 0.0
    %875 = vmatpush.msra.mxu0 0.0
    %876 = vmatpush.msra.mxu0 0.0
    %877 = vmatpush.msra.mxu0 0.0
    %878 = vmatpush.msra.mxu0 0.0
    %879 = vmatpush.msra.mxu0 0.0
    %880 = vmatpush.msra.mxu0 0.0
    %881 = vmatpush.msra.mxu0 %v861
    %882 = vmatmul.f32.gmra.mxu0 %v864
    %v883 = vpop.f32.mrf.mxu0
    %v884 = vadd.f32 0.0, %v883
    %885 = vdwg.mxu0
    %v887 = vsel %vm118, %v884, 0
    %889 = vmatpush.msra.mxu0 0.0
    %890 = vmatpush.msra.mxu0 0.0
    %891 = vmatpush.msra.mxu0 0.0
    %892 = vmatpush.msra.mxu0 0.0
    %893 = vmatpush.msra.mxu0 0.0
    %894 = vmatpush.msra.mxu0 0.0
    %895 = vmatpush.msra.mxu0 0.0
    %896 = vmatpush.msra.mxu0 0.0
    %897 = vmatpush.msra.mxu0 0.0
    %898 = vmatpush.msra.mxu0 0.0
    %899 = vmatpush.msra.mxu0 0.0
    %900 = vmatpush.msra.mxu0 0.0
    %901 = vmatpush.msra.mxu0 0.0
    %902 = vmatpush.msra.mxu0 0.0
    %903 = vmatpush.msra.mxu0 0.0
    %904 = vmatpush.msra.mxu0 %v44
    %905 = vmatmul.f32.gmra.mxu0 %v887
    %v906 = vpop.f32.mrf.mxu0
    %v907 = vadd.f32 0.0, %v906
    %908 = vdwg.mxu0
    %v909 = vadd.f32 %v818, %v907
    %s910 = scalar_lea.vmem %s7, 8
    %911 = vst.msk [vmem:[%s910] sm:$0xff] %vm48, %v909
    // Predicated region
    $region30: #{decomp_mha_forward.1} parent=1 // pred_check
      _
    $region31: #{decomp_mha_forward.1} parent=1 // pred_check_branch
      %913 = sbr.rel (0) target = $region33
    $region32: #{decomp_mha_forward.1} parent=1 // pred_region
      _
    $region33: #{decomp_mha_forward.1} parent=1 // pred_fallthru
      _
    // Predicated region
    $region34: #{decomp_mha_forward.1} parent=1 // pred_check
      _
    $region35: #{decomp_mha_forward.1} parent=1 // pred_check_branch
      %915 = sbr.rel (0) target = $region37
    $region36: #{decomp_mha_forward.1} parent=1 // pred_region
      %917 = vsyncadd [#allocation3], 0
      %s918 = sshll.u32 [#allocation2], 4
      %s919 = int_to_ptr.vmem [resolvable:$true] %s918
      %s920 = sshll.u32 %s8, 4
      %s921 = int_to_ptr.hbm [resolvable:$true] %s920
      %926 = dma.vmem_to_hbm [thread:$0]  %s919, 1024, %s921, [#allocation3], 128, 128, 8
    $region37: #{decomp_mha_forward.1} parent=1 // pred_fallthru
      _
    // Predicated region
    $region38: #{decomp_mha_forward.1} parent=1 // pred_check
      _
    $region39: #{decomp_mha_forward.1} parent=1 // pred_check_branch
      %928 = sbr.rel (0) target = $region41
    $region40: #{decomp_mha_forward.1} parent=1 // pred_region
      _
    $region41: #{decomp_mha_forward.1} parent=1 // pred_fallthru
      _
    // Predicated region
    $region42: #{decomp_mha_forward.1} parent=1 // pred_check
      _
    $region43: #{decomp_mha_forward.1} parent=1 // pred_check_branch
      %930 = sbr.rel (0) target = $region45
    $region44: #{decomp_mha_forward.1} parent=1 // pred_region
      %932 = dma.done [#allocation3], 1024
    $region45: #{decomp_mha_forward.1} parent=1 // pred_fallthru
      _
    %933 = vsyncpa [#allocation3], 1

</llo_original>
